<compile_context>
chip_gen: v7x
topology: tpu7x:2x2x1
jax: 0.10.0
libtpu: 0.0.40
codegen_flags: <defaults>
</compile_context>

<pallas_src>
import functools

import jax
import jax.numpy as jnp
from jax.experimental import pallas as pl
from jax.experimental.pallas import tpu as pltpu

_INV_SQRT2 = 0.7071067811865476
_LN_EPS = 1e-5


def _gelu(x):
    # exact erf-based GELU == torch.nn.GELU() (approximate='none')
    return 0.5 * x * (1.0 + jax.lax.erf(x * _INV_SQRT2))


def _sigmoid(x):
    return 1.0 / (1.0 + jnp.exp(-x))


def _layernorm(x, g, b):
    mu = jnp.mean(x, axis=-1, keepdims=True)
    var = jnp.mean((x - mu) ** 2, axis=-1, keepdims=True)
    return (x - mu) * jax.lax.rsqrt(var + _LN_EPS) * g + b


# ----------------------------------------------------------------------------
# Kernel
# ----------------------------------------------------------------------------
def _gmlp_kernel(x_ref,                # (TB*S, D) token slab for TB samples
                 vec_d,                # (3, D): ln1_g, ln1_b, b_out
                 w_in,                 # (D, F)
                 vec_f,                # (4, F): ln2_g, ln2_b, b_in, b_attn_o
                 w_qkv,                # (F, 3F) fused attention in-proj (Q pre-scaled)
                 b_qkv,                # (1, 3F)
                 w_ao,                 # (F, F)  attention out-proj
                 w_out,                # (F, D)
                 wsp,                  # (2, S, S): spatial_proj_i / _ii weights
                 bsp,                  # (2, S, 1): spatial_proj_i / _ii biases
                 wc1_full,             # (F, 10)  zero-padded cls Linear(K,10)
                 cls_rows,             # (2, 10): bc1, wc3 (Linear(10,1) weight)
                 wconv,                # (S, 1)   cls Conv1d(S,1,1) weight
                 cls_sc,               # (1, 2): [bconv, bc3]
                 o_ref,                # (TB*S, D) output block
                 *, TB, S, F, mm_dtype):
    xt = x_ref[...].astype(jnp.float32)            # (TB*S, D)

    ln1_g, ln1_b, b_out = vec_d[0:1, :], vec_d[1:2, :], vec_d[2:3, :]
    ln2_g, ln2_b = vec_f[0:1, :], vec_f[1:2, :]
    b_in, b_ao = vec_f[2:3, :], vec_f[3:4, :]

    def mm(a, b):
        # big MXU matmuls; operands optionally bf16, accumulation always f32
        return jnp.dot(a.astype(mm_dtype), b.astype(mm_dtype),
                       preferred_element_type=jnp.float32)

    # ---- outer gMLP block: LN1 + channel_proj_i (Linear(D,F) + GELU) -------
    # The u -> LN -> CLS chain is kept in f32 even when mm_dtype=bf16 so the
    # discrete prob<=0.5 spatial-weight decision cannot flip vs. the reference.
    h = _layernorm(xt, ln1_g, ln1_b)
    u = _gelu(jnp.dot(h, w_in[...],
                      preferred_element_type=jnp.float32) + b_in)  # (TB*S, F)

    # ---- SGU: LayerNorm(d_ffn) ---------------------------------------------
    v = _layernorm(u, ln2_g, ln2_b)                # (TB*S, F)

    # ---- CLS classifier, batched over the TB samples ------------------------
    # Zero-padded (F,10) weight => one lane-aligned matmul, no unaligned slice.
    c1 = _gelu(jnp.dot(v, wc1_full[...],
                       preferred_element_type=jnp.float32)
               + cls_rows[0:1, :])                                # (TB*S, 10)
    # Conv1d(seq_len -> 1, kernel=1): weighted sum over the seq axis.
    c2 = jnp.sum(c1.reshape(TB, S, 10) * wconv[...], axis=1) \
        + cls_sc[0:1, 0:1]                                        # (TB, 10)
    c2 = _gelu(c2)
    # Linear(10, 1) + Sigmoid
    logit = jnp.sum(c2 * cls_rows[1:2, :], axis=-1, keepdims=True) \
        + cls_sc[0:1, 1:2]                                        # (TB, 1)
    prob = _sigmoid(logit)
    # torch.round(sigmoid(.)) == 0  <=>  prob <= 0.5  (round-half-to-even)
    use_i = (prob <= 0.5).reshape(TB, 1, 1)

    # ---- spatial projection: Conv1d(S,S,1) == (S,S)@(S,F)+bias --------------
    # Fully vectorized: where-select the tiny (S,S)/(S,1) params per sample,
    # then ONE batched einsum over the whole slab (no per-sample branching,
    # no VMEM scratch, no scalar readbacks).
    vr = v.reshape(TB, S, F)
    w_all = wsp[...]                                              # (2, S, S)
    b_all = bsp[...]                                              # (2, S, 1)
    w_sel = jnp.where(use_i, w_all[0][None], w_all[1][None])      # (TB, S, S)
    b_sel = jnp.where(use_i, b_all[0][None], b_all[1][None])      # (TB, S, 1)
    spatial = (jnp.einsum('bos,bsf->bof', w_sel, vr,
                          preferred_element_type=jnp.float32)
               + b_sel).reshape(TB * S, F)                        # (TB*S, F)

    # ---- attn_extention: single-head MHA(u, u, u), batch_first --------------
    # 1/sqrt(F) scale already folded into the Q columns of w_qkv / b_qkv.
    qkv = mm(u, w_qkv[...]) + b_qkv[...]                          # (TB*S, 3F)
    qh = qkv[:, 0:F].reshape(TB, S, F)
    kh = qkv[:, F:2 * F].reshape(TB, S, F)
    vh = qkv[:, 2 * F:3 * F].reshape(TB, S, F)
    scores = jnp.einsum('bqf,bkf->bqk', qh, kh,
                        preferred_element_type=jnp.float32)       # (TB, S, S)
    scores = scores - jnp.max(scores, axis=-1, keepdims=True)
    e = jnp.exp(scores)
    attn_p = e * pl.reciprocal(jnp.sum(e, axis=-1, keepdims=True), approx=True)
    ctx = jnp.einsum('bqk,bkf->bqf', attn_p, vh,
                     preferred_element_type=jnp.float32).reshape(TB * S, F)
    attn_out = mm(ctx, w_ao[...]) + b_ao                          # (TB*S, F)

    # ---- SGU output: GELU(spatial + residual_u) + attention ----------------
    sgu_out = _gelu(spatial + u) + attn_out                       # (TB*S, F)

    # ---- channel_proj_ii (Linear(F,D)+GELU) + outer residual ----------------
    y = _gelu(mm(sgu_out, w_out[...]) + b_out)                    # (TB*S, D)
    o_ref[...] = (y + xt).astype(o_ref.dtype)

    # TODO(synk): the `self.wr.writerow(cls_idx)` CSV side-effect in the
    # evaluate=True path is host I/O with no Pallas equivalent; omitted.


# ----------------------------------------------------------------------------
# Wrapper
# ----------------------------------------------------------------------------
def _tpu_budgets():
    """Per-generation defaults: v5e/v6e have 128 MiB physical VMEM (big slabs,
    ~100 MiB scoped limit), v7x has 64 MiB (smaller slabs, ~48 MiB limit)."""
    phys = 64 * 1024 * 1024
    try:
        phys = int(pltpu.get_tpu_info().vmem_capacity_bytes)
    except Exception:
        pass
    vmem_limit = int(min(phys * 3 // 4, 100 * 1024 * 1024))
    target_rows = 256 if phys >= (96 << 20) else 128
    return vmem_limit, target_rows


def _choose_tb(B, S, target_rows):
    """Samples per grid step.  Priorities: (1) >=2 grid steps so both v7x
    TensorCores get work on the 'parallel' axis, (2) a balanced split (even G),
    (3) a slab that fits the per-chip row budget, (4) the biggest such slab
    (amortizes the ~0.35us/step pipeline overhead).  Keeps TB*S a multiple of 8
    (sublane alignment) whenever possible."""
    divisors = [t for t in range(1, B + 1) if B % t == 0]
    ok = [t for t in divisors if (t * S) % 8 == 0 or t == B] or divisors

    def key(t):
        g = B // t
        rows = t * S
        return (g >= 2,                                # feed both TCs (v7x)
                g % 2 == 0 or g == 1,                  # no odd imbalanced tail
                rows <= target_rows,                   # respect VMEM row budget
                rows if rows <= target_rows else -rows)  # biggest fitting slab

    return max(ok, key=key)


def gmlp_block(x, params, *, n_idx=0, matmul_dtype=jnp.float32,
               target_rows=None, vmem_limit_bytes=None):
    """Forward pass of multi_gMLPBLOCK_Extended on x of shape (B, S, D)."""
    B, S, D = x.shape
    F = params['w_in'].shape[1]
    K = params['wc1'].shape[0]
    assert (n_idx + 1) * K <= F, "cls slice out of range"

    auto_vmem, auto_rows = _tpu_budgets()
    if vmem_limit_bytes is None:
        vmem_limit_bytes = auto_vmem
    if target_rows is None:
        target_rows = auto_rows

    TB = _choose_tb(B, S, target_rows)
    G = B // TB

    inv_scale = 1.0 / (F ** 0.5)

    # ---- pack the many tiny parameters into a few lane-dense arrays --------
    vec_d = jnp.concatenate([params['ln1_g'], params['ln1_b'],
                             params['b_out']], axis=0)                  # (3, D)
    vec_f = jnp.concatenate([params['ln2_g'], params['ln2_b'],
                             params['b_in'], params['b_ao']], axis=0)   # (4, F)
    # fold the 1/sqrt(F) attention scale into the Q columns at pack time
    w_qkv = jnp.concatenate([params['w_q'] * inv_scale, params['w_k'],
                             params['w_v']], axis=1)                    # (F, 3F)
    b_qkv = jnp.concatenate([params['b_q'] * inv_scale, params['b_k'],
                             params['b_v']], axis=1)                    # (1, 3F)
    wsp = jnp.stack([params['wsp_i'], params['wsp_ii']], axis=0)        # (2,S,S)
    bsp = jnp.stack([params['bsp_i'], params['bsp_ii']], axis=0)        # (2,S,1)
    # zero-pad the CLS weight to a full (F,10) matrix (lane-aligned matmul)
    wc1_full = jnp.zeros((F, 10), jnp.float32)
    wc1_full = wc1_full.at[n_idx * K:(n_idx + 1) * K, :].set(params['wc1'])
    cls_rows = jnp.concatenate([params['bc1'], params['wc3']], axis=0)  # (2,10)
    cls_sc = jnp.concatenate([params['bconv'], params['bc3']], axis=1)  # (1, 2)

    w_ao = params['w_ao']
    w_out = params['w_out']
    if matmul_dtype != jnp.float32:
        # store the big projection weights in the matmul dtype in HBM: halves
        # parameter DMA bytes and resident VMEM.  w_in stays f32 because the
        # u -> LN -> CLS chain must stay f32 (discrete prob<=0.5 decision).
        w_qkv = w_qkv.astype(matmul_dtype)
        w_ao = w_ao.astype(matmul_dtype)
        w_out = w_out.astype(matmul_dtype)

    plist = [vec_d, params['w_in'], vec_f, w_qkv, b_qkv, w_ao, w_out,
             wsp, bsp, wc1_full, cls_rows, params['wconv'], cls_sc]

    # token-major 2-D I/O slab: (B*S, D); per-grid-step block is (TB*S, D).
    # NOTE: for production, pad D to a multiple of 128 (lane-dense output ->
    # unmasked vst); the toy D=32 case is store-bound-irrelevant.
    x2d = x.reshape(B * S, D)

    kernel = functools.partial(_gmlp_kernel, TB=TB, S=S, F=F,
                               mm_dtype=matmul_dtype)

    def rep_spec(a):
        # full-array block with a constant block index: loaded once, never
        # re-fetched.  NOTE: at production F, keep these weights in bf16 and/or
        # K/N-tile w_qkv/w_ao/w_out over an extra grid axis so the resident
        # footprint fits v7x's 64 MiB VMEM.
        nd = a.ndim
        return pl.BlockSpec(a.shape, lambda i, _nd=nd: (0,) * _nd)

    out2d = pl.pallas_call(
        kernel,
        out_shape=jax.ShapeDtypeStruct((B * S, D), x.dtype),
        grid=(G,),
        in_specs=[pl.BlockSpec((TB * S, D), lambda i: (i, 0))]
                 + [rep_spec(a) for a in plist],
        out_specs=pl.BlockSpec((TB * S, D), lambda i: (i, 0)),
        compiler_params=pltpu.CompilerParams(
            dimension_semantics=("parallel",),
            vmem_limit_bytes=vmem_limit_bytes),
    )(x2d, *plist)

    return out2d.reshape(B, S, D)


# ----------------------------------------------------------------------------
# Parameters + pure-JAX reference (mirrors the PyTorch forward)
# ----------------------------------------------------------------------------
def init_params(key, d_model, d_ffn, seq_len):
    K = d_ffn // 24
    ks = jax.random.split(key, 16)

    def unif(k, shape, fan_in):
        bound = 1.0 / (fan_in ** 0.5)
        return jax.random.uniform(k, shape, jnp.float32, -bound, bound)

    p = {}
    # outer layer_norm (default init)
    p['ln1_g'] = jnp.ones((1, d_model), jnp.float32)
    p['ln1_b'] = jnp.zeros((1, d_model), jnp.float32)
    # channel_proj_i: Linear(d_model, d_ffn)
    p['w_in'] = unif(ks[0], (d_model, d_ffn), d_model)
    p['b_in'] = unif(ks[1], (1, d_ffn), d_model)
    # sgu.layer_norm
    p['ln2_g'] = jnp.ones((1, d_ffn), jnp.float32)
    p['ln2_b'] = jnp.zeros((1, d_ffn), jnp.float32)
    # sgu.spatial_cls: Linear(K,10) -> GELU -> Conv1d(S,1,1) -> GELU -> Linear(10,1) -> Sigmoid
    p['wc1'] = unif(ks[2], (K, 10), K)
    p['bc1'] = unif(ks[3], (1, 10), K)
    p['wconv'] = unif(ks[4], (seq_len, 1), seq_len)
    p['bconv'] = unif(ks[5], (1, 1), seq_len)
    p['wc3'] = unif(ks[6], (1, 10), 10)
    p['bc3'] = unif(ks[7], (1, 1), 10)
    # sgu.spatial_proj_i / _ii: Conv1d(S, S, 1) -> (S,S) weight + (S,1) bias
    p['wsp_i'] = unif(ks[8], (seq_len, seq_len), seq_len)
    p['bsp_i'] = jnp.full((seq_len, 1), -1.0, jnp.float32)   # nn.init.constant_(-1.0)
    p['wsp_ii'] = unif(ks[9], (seq_len, seq_len), seq_len)
    p['bsp_ii'] = jnp.full((seq_len, 1), 1.0, jnp.float32)   # nn.init.constant_(+1.0)
    # sgu.attn_extention: single-head MultiheadAttention (weights pre-transposed: y = x @ w + b)
    p['w_q'] = unif(ks[10], (d_ffn, d_ffn), d_ffn)
    p['w_k'] = unif(ks[11], (d_ffn, d_ffn), d_ffn)
    p['w_v'] = unif(ks[12], (d_ffn, d_ffn), d_ffn)
    p['b_q'] = jnp.zeros((1, d_ffn), jnp.float32)
    p['b_k'] = jnp.zeros((1, d_ffn), jnp.float32)
    p['b_v'] = jnp.zeros((1, d_ffn), jnp.float32)
    p['w_ao'] = unif(ks[13], (d_ffn, d_ffn), d_ffn)
    p['b_ao'] = jnp.zeros((1, d_ffn), jnp.float32)
    # channel_proj_ii: Linear(d_ffn, d_model)
    p['w_out'] = unif(ks[14], (d_ffn, d_model), d_ffn)
    p['b_out'] = unif(ks[15], (1, d_model), d_ffn)
    return p


def ref_forward(x, p, n_idx=0):
    """Pure-JAX (f32, XLA) reference mirroring the PyTorch forward."""
    F = p['w_in'].shape[1]
    K = p['wc1'].shape[0]
    res = x
    h = _layernorm(x, p['ln1_g'], p['ln1_b'])
    u = _gelu(h @ p['w_in'] + p['b_in'])                               # (B,S,F)

    # --- SGU ---
    v = _layernorm(u, p['ln2_g'], p['ln2_b'])
    cls_in = v[:, :, n_idx * K:(n_idx + 1) * K]                        # (B,S,K)
    c1 = _gelu(cls_in @ p['wc1'] + p['bc1'])                           # (B,S,10)
    c2 = jnp.sum(c1 * p['wconv'][None, :, :], axis=1) + p['bconv'][0, 0]
    c2 = _gelu(c2)                                                     # (B,10)
    logit = jnp.sum(c2 * p['wc3'], axis=-1, keepdims=True) + p['bc3'][0, 0]
    prob = _sigmoid(logit)                                             # (B,1)
    use_i = (prob <= 0.5)[:, :, None]                                  # (B,1,1)
    w_sp = jnp.where(use_i, p['wsp_i'][None], p['wsp_ii'][None])
    b_sp = jnp.where(use_i, p['bsp_i'][None], p['bsp_ii'][None])
    spatial = jnp.einsum('bos,bsf->bof', w_sp, v) + b_sp               # (B,S,F)

    q = u @ p['w_q'] + p['b_q']
    k = u @ p['w_k'] + p['b_k']
    vv = u @ p['w_v'] + p['b_v']
    scores = jnp.einsum('bqf,bkf->bqk', q, k) / jnp.sqrt(jnp.float32(F))
    attn = jax.nn.softmax(scores, axis=-1)
    attn_out = jnp.einsum('bqk,bkf->bqf', attn, vv) @ p['w_ao'] + p['b_ao']

    sgu_out = _gelu(spatial + u) + attn_out                            # (B,S,F)
    y = _gelu(sgu_out @ p['w_out'] + p['b_out'])                       # (B,S,D)
    return y + res


if __name__ == "__main__":
    # batch, seq_len, d_model, d_ffn  (d_ffn // 24 == 2 -> cls slice width 2)
    B, S, D, F = 2, 8, 32, 64
    key = jax.random.PRNGKey(0)
    kx, kp = jax.random.split(key)
    x = jax.random.normal(kx, (B, S, D), jnp.float32)
    params = init_params(kp, D, F, S)

    out = gmlp_block(x, params, n_idx=0)
    out = jax.block_until_ready(out)

    assert out.shape == (B, S, D)
    assert bool(jnp.all(jnp.isfinite(out)))

    ref = ref_forward(x, params, n_idx=0)
    max_err = float(jnp.max(jnp.abs(out - ref)))
    if max_err > 1e-2:
        raise AssertionError(f"kernel mismatch vs reference, max_err={max_err}")
    print("KERNEL_OK")
</pallas_src>

<mosaic_0001>
module attributes {stable_mosaic.version = 11 : i64} {
  func.func @_gmlp_kernel(%arg0: i32, %arg1: memref<8x32xf32, #tpu.memory_space<vmem>>, %arg2: memref<3x32xf32, #tpu.memory_space<vmem>>, %arg3: memref<32x64xf32, #tpu.memory_space<vmem>>, %arg4: memref<4x64xf32, #tpu.memory_space<vmem>>, %arg5: memref<64x192xf32, #tpu.memory_space<vmem>>, %arg6: memref<1x192xf32, #tpu.memory_space<vmem>>, %arg7: memref<64x64xf32, #tpu.memory_space<vmem>>, %arg8: memref<64x32xf32, #tpu.memory_space<vmem>>, %arg9: memref<2x8x8xf32, #tpu.memory_space<vmem>>, %arg10: memref<2x8x1xf32, #tpu.memory_space<vmem>>, %arg11: memref<64x10xf32, #tpu.memory_space<vmem>>, %arg12: memref<2x10xf32, #tpu.memory_space<vmem>>, %arg13: memref<8x1xf32, #tpu.memory_space<vmem>>, %arg14: memref<1x2xf32, #tpu.memory_space<vmem>>, %arg15: memref<8x32xf32, #tpu.memory_space<vmem>>) attributes {dimension_semantics = [#tpu.dimension_semantics<parallel>], iteration_bounds = array<i64: 2>, scalar_prefetch = 0 : i64, scratch_operands = 0 : i64, tpu.core_type = #tpu.core_type<tc>, window_params = [{transform_indices = @transform_0, window_bounds = array<i64: 8, 32>}, {pipeline_mode = #tpu.pipeline_mode<synchronous>, transform_indices = @transform_1, window_bounds = array<i64: 3, 32>}, {pipeline_mode = #tpu.pipeline_mode<synchronous>, transform_indices = @transform_2, window_bounds = array<i64: 32, 64>}, {pipeline_mode = #tpu.pipeline_mode<synchronous>, transform_indices = @transform_3, window_bounds = array<i64: 4, 64>}, {pipeline_mode = #tpu.pipeline_mode<synchronous>, transform_indices = @transform_4, window_bounds = array<i64: 64, 192>}, {pipeline_mode = #tpu.pipeline_mode<synchronous>, transform_indices = @transform_5, window_bounds = array<i64: 1, 192>}, {pipeline_mode = #tpu.pipeline_mode<synchronous>, transform_indices = @transform_6, window_bounds = array<i64: 64, 64>}, {pipeline_mode = #tpu.pipeline_mode<synchronous>, transform_indices = @transform_7, window_bounds = array<i64: 64, 32>}, {pipeline_mode = #tpu.pipeline_mode<synchronous>, transform_indices = @transform_8, window_bounds = array<i64: 2, 8, 8>}, {pipeline_mode = #tpu.pipeline_mode<synchronous>, transform_indices = @transform_9, window_bounds = array<i64: 2, 8, 1>}, {pipeline_mode = #tpu.pipeline_mode<synchronous>, transform_indices = @transform_10, window_bounds = array<i64: 64, 10>}, {pipeline_mode = #tpu.pipeline_mode<synchronous>, transform_indices = @transform_11, window_bounds = array<i64: 2, 10>}, {pipeline_mode = #tpu.pipeline_mode<synchronous>, transform_indices = @transform_12, window_bounds = array<i64: 8, 1>}, {pipeline_mode = #tpu.pipeline_mode<synchronous>, transform_indices = @transform_13, window_bounds = array<i64: 1, 2>}, {transform_indices = @transform_14, window_bounds = array<i64: 8, 32>}]} {
    %c0 = arith.constant 0 : index
    %c0_0 = arith.constant 0 : index
    %0 = vector.load %arg1[%c0, %c0_0] : memref<8x32xf32, #tpu.memory_space<vmem>>, vector<8x32xf32>
    %c0_1 = arith.constant 0 : index
    %c0_2 = arith.constant 0 : index
    %1 = vector.load %arg2[%c0_1, %c0_2] : memref<3x32xf32, #tpu.memory_space<vmem>>, vector<1x32xf32>
    %c1 = arith.constant 1 : index
    %c0_3 = arith.constant 0 : index
    %2 = vector.load %arg2[%c1, %c0_3] : memref<3x32xf32, #tpu.memory_space<vmem>>, vector<1x32xf32>
    %c2 = arith.constant 2 : index
    %c0_4 = arith.constant 0 : index
    %3 = vector.load %arg2[%c2, %c0_4] : memref<3x32xf32, #tpu.memory_space<vmem>>, vector<1x32xf32>
    %c0_5 = arith.constant 0 : index
    %c0_6 = arith.constant 0 : index
    %4 = vector.load %arg4[%c0_5, %c0_6] : memref<4x64xf32, #tpu.memory_space<vmem>>, vector<1x64xf32>
    %c1_7 = arith.constant 1 : index
    %c0_8 = arith.constant 0 : index
    %5 = vector.load %arg4[%c1_7, %c0_8] : memref<4x64xf32, #tpu.memory_space<vmem>>, vector<1x64xf32>
    %c2_9 = arith.constant 2 : index
    %c0_10 = arith.constant 0 : index
    %6 = vector.load %arg4[%c2_9, %c0_10] : memref<4x64xf32, #tpu.memory_space<vmem>>, vector<1x64xf32>
    %c3 = arith.constant 3 : index
    %c0_11 = arith.constant 0 : index
    %7 = vector.load %arg4[%c3, %c0_11] : memref<4x64xf32, #tpu.memory_space<vmem>>, vector<1x64xf32>
    %cst = arith.constant dense<0.000000e+00> : vector<8xf32>
    %8 = vector.multi_reduction <add>, %0, %cst [1] : vector<8x32xf32> to vector<8xf32>
    %9 = vector.shape_cast %8 : vector<8xf32> to vector<8x1xf32>
    %cst_12 = arith.constant 3.200000e+01 : f32
    %10 = vector.broadcast %cst_12 : f32 to vector<8x1xf32>
    %11 = arith.divf %9, %10 : vector<8x1xf32>
    %12 = vector.broadcast %11 : vector<8x1xf32> to vector<8x32xf32>
    %13 = arith.subf %0, %12 : vector<8x32xf32>
    %14 = arith.mulf %13, %13 : vector<8x32xf32>
    %cst_13 = arith.constant dense<0.000000e+00> : vector<8xf32>
    %15 = vector.multi_reduction <add>, %14, %cst_13 [1] : vector<8x32xf32> to vector<8xf32>
    %16 = vector.shape_cast %15 : vector<8xf32> to vector<8x1xf32>
    %cst_14 = arith.constant 3.200000e+01 : f32
    %17 = vector.broadcast %cst_14 : f32 to vector<8x1xf32>
    %18 = arith.divf %16, %17 : vector<8x1xf32>
    %19 = vector.broadcast %11 : vector<8x1xf32> to vector<8x32xf32>
    %20 = arith.subf %0, %19 : vector<8x32xf32>
    %cst_15 = arith.constant 9.99999974E-6 : f32
    %21 = vector.broadcast %cst_15 : f32 to vector<8x1xf32>
    %22 = arith.addf %18, %21 : vector<8x1xf32>
    %23 = math.rsqrt %22 : vector<8x1xf32>
    %24 = vector.broadcast %23 : vector<8x1xf32> to vector<8x32xf32>
    %25 = arith.mulf %20, %24 : vector<8x32xf32>
    %26 = vector.broadcast %1 : vector<1x32xf32> to vector<8x32xf32>
    %27 = arith.mulf %25, %26 : vector<8x32xf32>
    %28 = vector.broadcast %2 : vector<1x32xf32> to vector<8x32xf32>
    %29 = arith.addf %27, %28 : vector<8x32xf32>
    %c0_16 = arith.constant 0 : index
    %c0_17 = arith.constant 0 : index
    %30 = vector.load %arg3[%c0_16, %c0_17] : memref<32x64xf32, #tpu.memory_space<vmem>>, vector<32x64xf32>
    %cst_18 = arith.constant dense<0.000000e+00> : vector<8x64xf32>
    %31 = tpu.matmul %29, %30, %cst_18 {dimension_numbers = #tpu.dot_dimension_numbers<[1], [0], [0], [1], [0, 0, 1, 1], [], []>} : vector<8x32xf32>, vector<32x64xf32>, vector<8x64xf32> -> vector<8x64xf32>
    %32 = vector.broadcast %6 : vector<1x64xf32> to vector<8x64xf32>
    %33 = arith.addf %31, %32 : vector<8x64xf32>
    %cst_19 = arith.constant 5.000000e-01 : f32
    %34 = vector.broadcast %cst_19 : f32 to vector<8x64xf32>
    %35 = arith.mulf %34, %33 : vector<8x64xf32>
    %cst_20 = arith.constant 0.707106769 : f32
    %36 = vector.broadcast %cst_20 : f32 to vector<8x64xf32>
    %37 = arith.mulf %33, %36 : vector<8x64xf32>
    %38 = math.erf %37 : vector<8x64xf32>
    %cst_21 = arith.constant 1.000000e+00 : f32
    %39 = vector.broadcast %cst_21 : f32 to vector<8x64xf32>
    %40 = arith.addf %39, %38 : vector<8x64xf32>
    %41 = arith.mulf %35, %40 : vector<8x64xf32>
    %cst_22 = arith.constant dense<0.000000e+00> : vector<8xf32>
    %42 = vector.multi_reduction <add>, %41, %cst_22 [1] : vector<8x64xf32> to vector<8xf32>
    %43 = vector.shape_cast %42 : vector<8xf32> to vector<8x1xf32>
    %cst_23 = arith.constant 6.400000e+01 : f32
    %44 = vector.broadcast %cst_23 : f32 to vector<8x1xf32>
    %45 = arith.divf %43, %44 : vector<8x1xf32>
    %46 = vector.broadcast %45 : vector<8x1xf32> to vector<8x64xf32>
    %47 = arith.subf %41, %46 : vector<8x64xf32>
    %48 = arith.mulf %47, %47 : vector<8x64xf32>
    %cst_24 = arith.constant dense<0.000000e+00> : vector<8xf32>
    %49 = vector.multi_reduction <add>, %48, %cst_24 [1] : vector<8x64xf32> to vector<8xf32>
    %50 = vector.shape_cast %49 : vector<8xf32> to vector<8x1xf32>
    %cst_25 = arith.constant 6.400000e+01 : f32
    %51 = vector.broadcast %cst_25 : f32 to vector<8x1xf32>
    %52 = arith.divf %50, %51 : vector<8x1xf32>
    %53 = vector.broadcast %45 : vector<8x1xf32> to vector<8x64xf32>
    %54 = arith.subf %41, %53 : vector<8x64xf32>
    %cst_26 = arith.constant 9.99999974E-6 : f32
    %55 = vector.broadcast %cst_26 : f32 to vector<8x1xf32>
    %56 = arith.addf %52, %55 : vector<8x1xf32>
    %57 = math.rsqrt %56 : vector<8x1xf32>
    %58 = vector.broadcast %57 : vector<8x1xf32> to vector<8x64xf32>
    %59 = arith.mulf %54, %58 : vector<8x64xf32>
    %60 = vector.broadcast %4 : vector<1x64xf32> to vector<8x64xf32>
    %61 = arith.mulf %59, %60 : vector<8x64xf32>
    %62 = vector.broadcast %5 : vector<1x64xf32> to vector<8x64xf32>
    %63 = arith.addf %61, %62 : vector<8x64xf32>
    %c0_27 = arith.constant 0 : index
    %c0_28 = arith.constant 0 : index
    %64 = vector.load %arg11[%c0_27, %c0_28] : memref<64x10xf32, #tpu.memory_space<vmem>>, vector<64x10xf32>
    %cst_29 = arith.constant dense<0.000000e+00> : vector<8x10xf32>
    %65 = tpu.matmul %63, %64, %cst_29 {dimension_numbers = #tpu.dot_dimension_numbers<[1], [0], [0], [1], [0, 0, 1, 1], [], []>} : vector<8x64xf32>, vector<64x10xf32>, vector<8x10xf32> -> vector<8x10xf32>
    %c0_30 = arith.constant 0 : index
    %c0_31 = arith.constant 0 : index
    %66 = vector.load %arg12[%c0_30, %c0_31] : memref<2x10xf32, #tpu.memory_space<vmem>>, vector<1x10xf32>
    %67 = vector.broadcast %66 : vector<1x10xf32> to vector<8x10xf32>
    %68 = arith.addf %65, %67 : vector<8x10xf32>
    %cst_32 = arith.constant 5.000000e-01 : f32
    %69 = vector.broadcast %cst_32 : f32 to vector<8x10xf32>
    %70 = arith.mulf %69, %68 : vector<8x10xf32>
    %cst_33 = arith.constant 0.707106769 : f32
    %71 = vector.broadcast %cst_33 : f32 to vector<8x10xf32>
    %72 = arith.mulf %68, %71 : vector<8x10xf32>
    %73 = math.erf %72 : vector<8x10xf32>
    %cst_34 = arith.constant 1.000000e+00 : f32
    %74 = vector.broadcast %cst_34 : f32 to vector<8x10xf32>
    %75 = arith.addf %74, %73 : vector<8x10xf32>
    %76 = arith.mulf %70, %75 : vector<8x10xf32>
    %77 = vector.shape_cast %76 : vector<8x10xf32> to vector<1x8x10xf32>
    %c0_35 = arith.constant 0 : index
    %c0_36 = arith.constant 0 : index
    %78 = vector.load %arg13[%c0_35, %c0_36] : memref<8x1xf32, #tpu.memory_space<vmem>>, vector<8x1xf32>
    %79 = vector.shape_cast %78 : vector<8x1xf32> to vector<1x8x1xf32>
    %80 = vector.broadcast %79 : vector<1x8x1xf32> to vector<1x8x10xf32>
    %81 = arith.mulf %77, %80 : vector<1x8x10xf32>
    %cst_37 = arith.constant dense<0.000000e+00> : vector<1x10xf32>
    %82 = vector.multi_reduction <add>, %81, %cst_37 [1] : vector<1x8x10xf32> to vector<1x10xf32>
    %c0_38 = arith.constant 0 : index
    %c0_39 = arith.constant 0 : index
    %83 = vector.load %arg14[%c0_38, %c0_39] : memref<1x2xf32, #tpu.memory_space<vmem>>, vector<1x1xf32>
    %84 = vector.broadcast %83 : vector<1x1xf32> to vector<1x10xf32>
    %85 = arith.addf %82, %84 : vector<1x10xf32>
    %cst_40 = arith.constant 5.000000e-01 : f32
    %86 = vector.broadcast %cst_40 : f32 to vector<1x10xf32>
    %87 = arith.mulf %86, %85 : vector<1x10xf32>
    %cst_41 = arith.constant 0.707106769 : f32
    %88 = vector.broadcast %cst_41 : f32 to vector<1x10xf32>
    %89 = arith.mulf %85, %88 : vector<1x10xf32>
    %90 = math.erf %89 : vector<1x10xf32>
    %cst_42 = arith.constant 1.000000e+00 : f32
    %91 = vector.broadcast %cst_42 : f32 to vector<1x10xf32>
    %92 = arith.addf %91, %90 : vector<1x10xf32>
    %93 = arith.mulf %87, %92 : vector<1x10xf32>
    %c1_43 = arith.constant 1 : index
    %c0_44 = arith.constant 0 : index
    %94 = vector.load %arg12[%c1_43, %c0_44] : memref<2x10xf32, #tpu.memory_space<vmem>>, vector<1x10xf32>
    %95 = arith.mulf %93, %94 : vector<1x10xf32>
    %cst_45 = arith.constant dense<0.000000e+00> : vector<1xf32>
    %96 = vector.multi_reduction <add>, %95, %cst_45 [1] : vector<1x10xf32> to vector<1xf32>
    %97 = vector.shape_cast %96 : vector<1xf32> to vector<1x1xf32>
    %c0_46 = arith.constant 0 : index
    %c1_47 = arith.constant 1 : index
    %98 = vector.load %arg14[%c0_46, %c1_47] : memref<1x2xf32, #tpu.memory_space<vmem>>, vector<1x1xf32>
    %99 = arith.addf %97, %98 : vector<1x1xf32>
    %cst_48 = arith.constant 0.000000e+00 : f32
    %100 = vector.broadcast %cst_48 : f32 to vector<1x1xf32>
    %101 = arith.subf %100, %99 : vector<1x1xf32>
    %102 = math.exp %101 : vector<1x1xf32>
    %cst_49 = arith.constant 1.000000e+00 : f32
    %103 = vector.broadcast %cst_49 : f32 to vector<1x1xf32>
    %104 = arith.addf %103, %102 : vector<1x1xf32>
    %cst_50 = arith.constant 1.000000e+00 : f32
    %105 = vector.broadcast %cst_50 : f32 to vector<1x1xf32>
    %106 = arith.divf %105, %104 : vector<1x1xf32>
    %cst_51 = arith.constant 5.000000e-01 : f32
    %107 = vector.broadcast %cst_51 : f32 to vector<1x1xf32>
    %108 = arith.cmpf ole, %106, %107 : vector<1x1xf32>
    %109 = vector.shape_cast %108 : vector<1x1xi1> to vector<1x1x1xi1>
    %110 = vector.shape_cast %63 : vector<8x64xf32> to vector<1x8x64xf32>
    %c0_52 = arith.constant 0 : index
    %c0_53 = arith.constant 0 : index
    %c0_54 = arith.constant 0 : index
    %111 = vector.load %arg9[%c0_52, %c0_53, %c0_54] : memref<2x8x8xf32, #tpu.memory_space<vmem>>, vector<2x8x8xf32>
    %c0_55 = arith.constant 0 : index
    %c0_56 = arith.constant 0 : index
    %c0_57 = arith.constant 0 : index
    %112 = vector.load %arg10[%c0_55, %c0_56, %c0_57] : memref<2x8x1xf32, #tpu.memory_space<vmem>>, vector<2x8x1xf32>
    %113 = vector.extract_strided_slice %111 {offsets = [0, 0, 0], sizes = [1, 8, 8], strides = [1, 1, 1]} : vector<2x8x8xf32> to vector<1x8x8xf32>
    %114 = vector.shape_cast %113 : vector<1x8x8xf32> to vector<8x8xf32>
    %115 = vector.shape_cast %114 : vector<8x8xf32> to vector<1x8x8xf32>
    %116 = vector.extract_strided_slice %111 {offsets = [1, 0, 0], sizes = [1, 8, 8], strides = [1, 1, 1]} : vector<2x8x8xf32> to vector<1x8x8xf32>
    %117 = vector.shape_cast %116 : vector<1x8x8xf32> to vector<8x8xf32>
    %118 = vector.shape_cast %117 : vector<8x8xf32> to vector<1x8x8xf32>
    %119 = vector.shape_cast %109 : vector<1x1x1xi1> to vector<1x1x1xi1>
    %120 = vector.broadcast %119 : vector<1x1x1xi1> to vector<1x8x8xi1>
    %121 = arith.select %120, %115, %118 : vector<1x8x8xi1>, vector<1x8x8xf32>
    %122 = vector.extract_strided_slice %112 {offsets = [0, 0, 0], sizes = [1, 8, 1], strides = [1, 1, 1]} : vector<2x8x1xf32> to vector<1x8x1xf32>
    %123 = vector.shape_cast %122 : vector<1x8x1xf32> to vector<8x1xf32>
    %124 = vector.shape_cast %123 : vector<8x1xf32> to vector<1x8x1xf32>
    %125 = vector.extract_strided_slice %112 {offsets = [1, 0, 0], sizes = [1, 8, 1], strides = [1, 1, 1]} : vector<2x8x1xf32> to vector<1x8x1xf32>
    %126 = vector.shape_cast %125 : vector<1x8x1xf32> to vector<8x1xf32>
    %127 = vector.shape_cast %126 : vector<8x1xf32> to vector<1x8x1xf32>
    %128 = vector.shape_cast %109 : vector<1x1x1xi1> to vector<1x1x1xi1>
    %129 = vector.broadcast %128 : vector<1x1x1xi1> to vector<1x8x1xi1>
    %130 = arith.select %129, %124, %127 : vector<1x8x1xi1>, vector<1x8x1xf32>
    "tpu.trace_start"() <{level = 10 : i32, message = "bos,bsf->bof"}> : () -> ()
    %cst_58 = arith.constant dense<0.000000e+00> : vector<1x8x64xf32>
    %131 = tpu.matmul %121, %110, %cst_58 {dimension_numbers = #tpu.dot_dimension_numbers<[2], [1], [1], [2], [0, 0, 0, 1, 1, 2], [0], [0]>} : vector<1x8x8xf32>, vector<1x8x64xf32>, vector<1x8x64xf32> -> vector<1x8x64xf32>
    "tpu.trace_stop"() : () -> ()
    %132 = vector.broadcast %130 : vector<1x8x1xf32> to vector<1x8x64xf32>
    %133 = arith.addf %131, %132 : vector<1x8x64xf32>
    %134 = vector.shape_cast %133 : vector<1x8x64xf32> to vector<8x64xf32>
    %c0_59 = arith.constant 0 : index
    %c0_60 = arith.constant 0 : index
    %135 = vector.load %arg5[%c0_59, %c0_60] : memref<64x192xf32, #tpu.memory_space<vmem>>, vector<64x192xf32>
    %cst_61 = arith.constant dense<0.000000e+00> : vector<8x192xf32>
    %136 = tpu.matmul %41, %135, %cst_61 {dimension_numbers = #tpu.dot_dimension_numbers<[1], [0], [0], [1], [0, 0, 1, 1], [], []>} : vector<8x64xf32>, vector<64x192xf32>, vector<8x192xf32> -> vector<8x192xf32>
    %c0_62 = arith.constant 0 : index
    %c0_63 = arith.constant 0 : index
    %137 = vector.load %arg6[%c0_62, %c0_63] : memref<1x192xf32, #tpu.memory_space<vmem>>, vector<1x192xf32>
    %138 = vector.broadcast %137 : vector<1x192xf32> to vector<8x192xf32>
    %139 = arith.addf %136, %138 : vector<8x192xf32>
    %140 = vector.extract_strided_slice %139 {offsets = [0, 0], sizes = [8, 64], strides = [1, 1]} : vector<8x192xf32> to vector<8x64xf32>
    %141 = vector.shape_cast %140 : vector<8x64xf32> to vector<1x8x64xf32>
    %142 = vector.extract_strided_slice %139 {offsets = [0, 64], sizes = [8, 64], strides = [1, 1]} : vector<8x192xf32> to vector<8x64xf32>
    %143 = vector.shape_cast %142 : vector<8x64xf32> to vector<1x8x64xf32>
    %144 = vector.extract_strided_slice %139 {offsets = [0, 128], sizes = [8, 64], strides = [1, 1]} : vector<8x192xf32> to vector<8x64xf32>
    %145 = vector.shape_cast %144 : vector<8x64xf32> to vector<1x8x64xf32>
    "tpu.trace_start"() <{level = 10 : i32, message = "bqf,bkf->bqk"}> : () -> ()
    %cst_64 = arith.constant dense<0.000000e+00> : vector<1x8x8xf32>
    %146 = tpu.matmul %141, %143, %cst_64 {dimension_numbers = #tpu.dot_dimension_numbers<[2], [2], [1], [1], [0, 0, 0, 1, 1, 1], [0], [0]>} : vector<1x8x64xf32>, vector<1x8x64xf32>, vector<1x8x8xf32> -> vector<1x8x8xf32>
    "tpu.trace_stop"() : () -> ()
    %cst_65 = arith.constant dense<0xFF800000> : vector<1x8xf32>
    %147 = vector.multi_reduction <maximumf>, %146, %cst_65 [2] : vector<1x8x8xf32> to vector<1x8xf32>
    %148 = vector.shape_cast %147 : vector<1x8xf32> to vector<1x8x1xf32>
    %149 = vector.broadcast %148 : vector<1x8x1xf32> to vector<1x8x8xf32>
    %150 = arith.subf %146, %149 : vector<1x8x8xf32>
    %151 = math.exp %150 : vector<1x8x8xf32>
    %cst_66 = arith.constant dense<0.000000e+00> : vector<1x8xf32>
    %152 = vector.multi_reduction <add>, %151, %cst_66 [2] : vector<1x8x8xf32> to vector<1x8xf32>
    %153 = vector.shape_cast %152 : vector<1x8xf32> to vector<1x8x1xf32>
    %154 = tpu.reciprocal %153 {approx = true} : vector<1x8x1xf32> -> vector<1x8x1xf32>
    %155 = vector.broadcast %154 : vector<1x8x1xf32> to vector<1x8x8xf32>
    %156 = arith.mulf %151, %155 : vector<1x8x8xf32>
    "tpu.trace_start"() <{level = 10 : i32, message = "bqk,bkf->bqf"}> : () -> ()
    %cst_67 = arith.constant dense<0.000000e+00> : vector<1x8x64xf32>
    %157 = tpu.matmul %156, %145, %cst_67 {dimension_numbers = #tpu.dot_dimension_numbers<[2], [1], [1], [2], [0, 0, 0, 1, 1, 2], [0], [0]>} : vector<1x8x8xf32>, vector<1x8x64xf32>, vector<1x8x64xf32> -> vector<1x8x64xf32>
    "tpu.trace_stop"() : () -> ()
    %158 = vector.shape_cast %157 : vector<1x8x64xf32> to vector<8x64xf32>
    %c0_68 = arith.constant 0 : index
    %c0_69 = arith.constant 0 : index
    %159 = vector.load %arg7[%c0_68, %c0_69] : memref<64x64xf32, #tpu.memory_space<vmem>>, vector<64x64xf32>
    %cst_70 = arith.constant dense<0.000000e+00> : vector<8x64xf32>
    %160 = tpu.matmul %158, %159, %cst_70 {dimension_numbers = #tpu.dot_dimension_numbers<[1], [0], [0], [1], [0, 0, 1, 1], [], []>} : vector<8x64xf32>, vector<64x64xf32>, vector<8x64xf32> -> vector<8x64xf32>
    %161 = vector.broadcast %7 : vector<1x64xf32> to vector<8x64xf32>
    %162 = arith.addf %160, %161 : vector<8x64xf32>
    %163 = arith.addf %134, %41 : vector<8x64xf32>
    %cst_71 = arith.constant 5.000000e-01 : f32
    %164 = vector.broadcast %cst_71 : f32 to vector<8x64xf32>
    %165 = arith.mulf %164, %163 : vector<8x64xf32>
    %cst_72 = arith.constant 0.707106769 : f32
    %166 = vector.broadcast %cst_72 : f32 to vector<8x64xf32>
    %167 = arith.mulf %163, %166 : vector<8x64xf32>
    %168 = math.erf %167 : vector<8x64xf32>
    %cst_73 = arith.constant 1.000000e+00 : f32
    %169 = vector.broadcast %cst_73 : f32 to vector<8x64xf32>
    %170 = arith.addf %169, %168 : vector<8x64xf32>
    %171 = arith.mulf %165, %170 : vector<8x64xf32>
    %172 = arith.addf %171, %162 : vector<8x64xf32>
    %c0_74 = arith.constant 0 : index
    %c0_75 = arith.constant 0 : index
    %173 = vector.load %arg8[%c0_74, %c0_75] : memref<64x32xf32, #tpu.memory_space<vmem>>, vector<64x32xf32>
    %cst_76 = arith.constant dense<0.000000e+00> : vector<8x32xf32>
    %174 = tpu.matmul %172, %173, %cst_76 {dimension_numbers = #tpu.dot_dimension_numbers<[1], [0], [0], [1], [0, 0, 1, 1], [], []>} : vector<8x64xf32>, vector<64x32xf32>, vector<8x32xf32> -> vector<8x32xf32>
    %175 = vector.broadcast %3 : vector<1x32xf32> to vector<8x32xf32>
    %176 = arith.addf %174, %175 : vector<8x32xf32>
    %cst_77 = arith.constant 5.000000e-01 : f32
    %177 = vector.broadcast %cst_77 : f32 to vector<8x32xf32>
    %178 = arith.mulf %177, %176 : vector<8x32xf32>
    %cst_78 = arith.constant 0.707106769 : f32
    %179 = vector.broadcast %cst_78 : f32 to vector<8x32xf32>
    %180 = arith.mulf %176, %179 : vector<8x32xf32>
    %181 = math.erf %180 : vector<8x32xf32>
    %cst_79 = arith.constant 1.000000e+00 : f32
    %182 = vector.broadcast %cst_79 : f32 to vector<8x32xf32>
    %183 = arith.addf %182, %181 : vector<8x32xf32>
    %184 = arith.mulf %178, %183 : vector<8x32xf32>
    %185 = arith.addf %184, %0 : vector<8x32xf32>
    %c0_80 = arith.constant 0 : index
    %c0_81 = arith.constant 0 : index
    %186 = vector.load %arg15[%c0_80, %c0_81] : memref<8x32xf32, #tpu.memory_space<vmem>>, vector<8x32xf32>
    tpu.vector_store %arg15[%c0_80, %c0_81], %185 {strides = array<i32>} : memref<8x32xf32, #tpu.memory_space<vmem>>, vector<8x32xf32>,
    return
  }
  func.func @transform_0(%arg0: i32) -> (i32, i32) {
    %c0_i32 = arith.constant 0 : i32
    %c0_i32_0 = arith.constant 0 : i32
    return %arg0, %c0_i32 : i32, i32
  }
  func.func @transform_1(%arg0: i32) -> (i32, i32) {
    %c0_i32 = arith.constant 0 : i32
    %c0_i32_0 = arith.constant 0 : i32
    %c0_i32_1 = arith.constant 0 : i32
    return %c0_i32, %c0_i32_0 : i32, i32
  }
  func.func @transform_2(%arg0: i32) -> (i32, i32) {
    %c0_i32 = arith.constant 0 : i32
    %c0_i32_0 = arith.constant 0 : i32
    %c0_i32_1 = arith.constant 0 : i32
    return %c0_i32, %c0_i32_0 : i32, i32
  }
  func.func @transform_3(%arg0: i32) -> (i32, i32) {
    %c0_i32 = arith.constant 0 : i32
    %c0_i32_0 = arith.constant 0 : i32
    %c0_i32_1 = arith.constant 0 : i32
    return %c0_i32, %c0_i32_0 : i32, i32
  }
  func.func @transform_4(%arg0: i32) -> (i32, i32) {
    %c0_i32 = arith.constant 0 : i32
    %c0_i32_0 = arith.constant 0 : i32
    %c0_i32_1 = arith.constant 0 : i32
    return %c0_i32, %c0_i32_0 : i32, i32
  }
  func.func @transform_5(%arg0: i32) -> (i32, i32) {
    %c0_i32 = arith.constant 0 : i32
    %c0_i32_0 = arith.constant 0 : i32
    %c0_i32_1 = arith.constant 0 : i32
    return %c0_i32, %c0_i32_0 : i32, i32
  }
  func.func @transform_6(%arg0: i32) -> (i32, i32) {
    %c0_i32 = arith.constant 0 : i32
    %c0_i32_0 = arith.constant 0 : i32
    %c0_i32_1 = arith.constant 0 : i32
    return %c0_i32, %c0_i32_0 : i32, i32
  }
  func.func @transform_7(%arg0: i32) -> (i32, i32) {
    %c0_i32 = arith.constant 0 : i32
    %c0_i32_0 = arith.constant 0 : i32
    %c0_i32_1 = arith.constant 0 : i32
    return %c0_i32, %c0_i32_0 : i32, i32
  }
  func.func @transform_8(%arg0: i32) -> (i32, i32, i32) {
    %c0_i32 = arith.constant 0 : i32
    %c0_i32_0 = arith.constant 0 : i32
    %c0_i32_1 = arith.constant 0 : i32
    %c0_i32_2 = arith.constant 0 : i32
    return %c0_i32, %c0_i32_0, %c0_i32_1 : i32, i32, i32
  }
  func.func @transform_9(%arg0: i32) -> (i32, i32, i32) {
    %c0_i32 = arith.constant 0 : i32
    %c0_i32_0 = arith.constant 0 : i32
    %c0_i32_1 = arith.constant 0 : i32
    %c0_i32_2 = arith.constant 0 : i32
    return %c0_i32, %c0_i32_0, %c0_i32_1 : i32, i32, i32
  }
  func.func @transform_10(%arg0: i32) -> (i32, i32) {
    %c0_i32 = arith.constant 0 : i32
    %c0_i32_0 = arith.constant 0 : i32
    %c0_i32_1 = arith.constant 0 : i32
    return %c0_i32, %c0_i32_0 : i32, i32
  }
  func.func @transform_11(%arg0: i32) -> (i32, i32) {
    %c0_i32 = arith.constant 0 : i32
    %c0_i32_0 = arith.constant 0 : i32
    %c0_i32_1 = arith.constant 0 : i32
    return %c0_i32, %c0_i32_0 : i32, i32
  }
  func.func @transform_12(%arg0: i32) -> (i32, i32) {
    %c0_i32 = arith.constant 0 : i32
    %c0_i32_0 = arith.constant 0 : i32
    %c0_i32_1 = arith.constant 0 : i32
    return %c0_i32, %c0_i32_0 : i32, i32
  }
  func.func @transform_13(%arg0: i32) -> (i32, i32) {
    %c0_i32 = arith.constant 0 : i32
    %c0_i32_0 = arith.constant 0 : i32
    %c0_i32_1 = arith.constant 0 : i32
    return %c0_i32, %c0_i32_0 : i32, i32
  }
  func.func @transform_14(%arg0: i32) -> (i32, i32) {
    %c0_i32 = arith.constant 0 : i32
    %c0_i32_0 = arith.constant 0 : i32
    return %arg0, %c0_i32 : i32, i32
  }
}

</mosaic_0001>

<llo_original>
// kernel: tpu_custom_call.1
$region0: #{tpu_custom_call.1}
  #allocation0 [shape = 'u32[]', space=smem, size = 0x4, offset = 0x4, fixed_abs, tag = 'smem constant byte address 0x4 - core index']
  #allocation1 [shape = 'u32[144,128]{1,0:T(1,128)}', space=vmem, size = 0x12000, scoped, tag = 'internal scratch']
  %s0 = inlined_call_operand.hbm [shape: f32[16,32], index: 0, kind: input, shape index: {}]
  %s1 = inlined_call_operand.hbm [shape: f32[3,32], index: 1, kind: input, shape index: {}]
  %s2 = inlined_call_operand.hbm [shape: f32[32,64], index: 2, kind: input, shape index: {}]
  %s3 = inlined_call_operand.hbm [shape: f32[4,64], index: 3, kind: input, shape index: {}]
  %s4 = inlined_call_operand.vmem [shape: f32[64,192], index: 4, kind: input, shape index: {}]
  %s5 = inlined_call_operand.hbm [shape: f32[1,192], index: 5, kind: input, shape index: {}]
  %s6 = inlined_call_operand.vmem [shape: f32[64,64], index: 6, kind: input, shape index: {}]
  %s7 = inlined_call_operand.vmem [shape: f32[64,32], index: 7, kind: input, shape index: {}]
  %s8 = inlined_call_operand.hbm [shape: f32[2,8,8], index: 8, kind: input, shape index: {}]
  %s9 = inlined_call_operand.vmem [shape: f32[2,8,1], index: 9, kind: input, shape index: {}]
  %s10 = inlined_call_operand.vmem [shape: f32[64,10], index: 10, kind: input, shape index: {}]
  %s11 = inlined_call_operand.vmem [shape: f32[2,10], index: 11, kind: input, shape index: {}]
  %s12 = inlined_call_operand.vmem [shape: f32[8,1], index: 12, kind: input, shape index: {}]
  %s13 = inlined_call_operand.vmem [shape: f32[1,2], index: 13, kind: input, shape index: {}]
  %s14 = inlined_call_operand.hbm [shape: f32[16,32], index: 14, kind: output, shape index: {}]
  %s15 = sld [smem:[#allocation0]]
  $region113: #{tpu_custom_call.1} parent=0
    _
  %s17 = ssub.s32 1, %s15
  %s18 = scalar_select 0, %s17, %s15
  $region1: #{tpu_custom_call.1} parent=0
    #allocation2 [shape = 'u8[8192]{0}', space=vmem, size = 0x2000, scoped, tag = 'input window, operand 0']
    #allocation3 [shape = 's32[2]{0}', space=sflag, size = 0x8, scoped, tag = 'scoped memory for tpu_custom_call.1']
    #allocation4 [shape = 's32[2]{0}', space=sflag, size = 0x8, scoped, tag = 'scoped memory for tpu_custom_call.1']
    #allocation5 [shape = 'u8[2048]{0}', space=vmem, size = 0x800, scoped, tag = 'input window, operand 1, single buffered']
    #allocation6 [shape = 's32[1]{0}', space=sflag, size = 0x4, scoped, tag = 'scoped memory for tpu_custom_call.1']
    #allocation7 [shape = 'u8[16384]{0}', space=vmem, size = 0x4000, scoped, tag = 'input window, operand 2, single buffered']
    #allocation8 [shape = 'u8[2048]{0}', space=vmem, size = 0x800, scoped, tag = 'input window, operand 3, single buffered']
    #allocation9 [shape = 's32[1]{0}', space=sflag, size = 0x4, scoped, tag = 'scoped memory for tpu_custom_call.1']
    #allocation10 [shape = 'u8[1024]{0}', space=vmem, size = 0x400, scoped, tag = 'input window, operand 5, single buffered']
    #allocation11 [shape = 'u8[8192]{0}', space=vmem, size = 0x2000, scoped, tag = 'input window, operand 8, single buffered']
    #allocation12 [shape = 's32[1]{0}', space=sflag, size = 0x4, scoped, tag = 'scoped memory for tpu_custom_call.1']
    #allocation13 [shape = 'u8[8192]{0}', space=vmem, size = 0x2000, scoped, tag = 'output window, operand 0']
    %19 = vsyncpa [#allocation3], 0
    %s20 = scalar_lea.sflag [#allocation3], 1
    %21 = vsyncpa %s20, 0
    %22 = vsyncpa [#allocation6], 0
    %23 = vsyncpa [#allocation9], 0
    %24 = vsyncpa [#allocation12], 0
    %25 = vsyncpa [#allocation4], 0
    %s26 = scalar_lea.sflag [#allocation4], 1
    %27 = vsyncpa %s26, 0
    loop: start=0, step=1, limit=4
    $region2: #{tpu_custom_call.1} parent=1 // loop_pre_header
      _
    $region3: #{tpu_custom_call.1} parent=1 // loop_header
      %s29 = sphi 0, %s33
      %p30 = scmp.ge.s32.totalorder %s29, 4
      %s39 = sphi 0, %s41
      %s42 = sphi 0, %s39
      %s43 = sphi 0, %s42
      %s59 = sphi 0, %s43
      %s63 = sphi 0, %s63
      %s65 = sphi 0, %s63
      %s66 = sphi 0, %s65
      %s80 = sphi 0, %s66
      %s84 = sphi 0, %s84
      %s86 = sphi 0, %s84
      %s87 = sphi 0, %s86
      %s101 = sphi 0, %s87
      %s105 = sphi 0, %s105
      %s107 = sphi 0, %s105
      %s108 = sphi 0, %s107
      %s122 = sphi 0, %s108
      %s126 = sphi 0, %s126
      %s128 = sphi 0, %s126
      %s129 = sphi 0, %s128
      %s143 = sphi 0, %s129
      %s147 = sphi 0, %s147
      %s149 = sphi 0, %s147
      %s150 = sphi 0, %s149
      %s164 = sphi 0, %s150
      %s168 = sphi 0, %s168
      %s170 = sphi 0, %s168
      %s171 = sphi 0, %s170
      %s185 = sphi 0, %s171
      %s189 = sphi 0, %s189
      %s191 = sphi 0, %s189
      %s192 = sphi 0, %s191
      %s206 = sphi 0, %s192
      %s210 = sphi 0, %s210
      %s212 = sphi 0, %s210
      %s213 = sphi 0, %s212
      %s227 = sphi 0, %s213
      %s231 = sphi 0, %s231
      %s233 = sphi 0, %s231
      %s234 = sphi 0, %s233
      %s248 = sphi 0, %s234
      %s252 = sphi 0, %s252
      %s254 = sphi 0, %s252
      %s255 = sphi 0, %s254
      %s269 = sphi 0, %s255
      %s273 = sphi 0, %s273
      %s275 = sphi 0, %s273
      %s276 = sphi 0, %s275
      %s290 = sphi 0, %s276
      %s294 = sphi 0, %s294
      %s296 = sphi 0, %s294
      %s297 = sphi 0, %s296
      %s311 = sphi 0, %s297
      %s315 = sphi 0, %s315
      %s317 = sphi 0, %s315
      %s318 = sphi 0, %s317
      %s332 = sphi 0, %s318
      %s338 = sphi 0, %s340
      %s341 = sphi 0, %s338
      %s342 = sphi 0, %s341
      %s358 = sphi 0, %s342
    $region4: #{tpu_custom_call.1} parent=1 // loop_header_branch
      %32 = sbr.rel (%p30) target = $region8
    $region5: #{tpu_custom_call.1} parent=1 // loop_body
      %s34 = ssub.s32 %s29, 1
      %s35 = ssub.s32 %s29, 2
      %s36 = sadd.s32 %s29, 1
      %s37 = ssub.s32 %s29, %s36
      %p38 = scmp.eq.s32.totalorder %s37, 0
      %s40 = sadd.s32 %s39, 1
      %s41 = scalar_select %p38, %s39, %s40
      %p44 = pneg %p38
      %p45 = scmp.eq.s32.totalorder %s29, 1
      %p46 = por %p44, %p45
      %p47 = scmp.ne.s32.totalorder %s39, %s42
      %p48 = scmp.eq.s32.totalorder %s29, 0
      %p49 = por %p47, %p48
      %p50 = scmp.ne.s32.totalorder %s39, %s42
      %p51 = scmp.eq.s32.totalorder %s34, 1
      %p52 = por %p50, %p51
      %p53 = scmp.ne.s32.totalorder %s42, %s43
      %p54 = scmp.eq.s32.totalorder %s34, 0
      %p55 = por %p53, %p54
      %p56 = scmp.ne.s32.totalorder %s42, %s43
      %p57 = scmp.eq.s32.totalorder %s35, 1
      %p58 = por %p56, %p57
      %p60 = scmp.ne.s32.totalorder %s43, %s59
      %p61 = scmp.eq.s32.totalorder %s35, 0
      %p62 = por %p60, %p61
      %s64 = sadd.s32 %s63, 1
      %p67 = scmp.eq.s32.totalorder %s29, 1
      %p68 = scmp.ne.s32.totalorder %s63, %s65
      %p69 = scmp.eq.s32.totalorder %s29, 0
      %p70 = por %p68, %p69
      %p71 = scmp.ne.s32.totalorder %s63, %s65
      %p72 = scmp.eq.s32.totalorder %s34, 1
      %p73 = por %p71, %p72
      %p74 = scmp.ne.s32.totalorder %s65, %s66
      %p75 = scmp.eq.s32.totalorder %s34, 0
      %p76 = por %p74, %p75
      %p77 = scmp.ne.s32.totalorder %s65, %s66
      %p78 = scmp.eq.s32.totalorder %s35, 1
      %p79 = por %p77, %p78
      %p81 = scmp.ne.s32.totalorder %s66, %s80
      %p82 = scmp.eq.s32.totalorder %s35, 0
      %p83 = por %p81, %p82
      %s85 = sadd.s32 %s84, 1
      %p88 = scmp.eq.s32.totalorder %s29, 1
      %p89 = scmp.ne.s32.totalorder %s84, %s86
      %p90 = scmp.eq.s32.totalorder %s29, 0
      %p91 = por %p89, %p90
      %p92 = scmp.ne.s32.totalorder %s84, %s86
      %p93 = scmp.eq.s32.totalorder %s34, 1
      %p94 = por %p92, %p93
      %p95 = scmp.ne.s32.totalorder %s86, %s87
      %p96 = scmp.eq.s32.totalorder %s34, 0
      %p97 = por %p95, %p96
      %p98 = scmp.ne.s32.totalorder %s86, %s87
      %p99 = scmp.eq.s32.totalorder %s35, 1
      %p100 = por %p98, %p99
      %p102 = scmp.ne.s32.totalorder %s87, %s101
      %p103 = scmp.eq.s32.totalorder %s35, 0
      %p104 = por %p102, %p103
      %s106 = sadd.s32 %s105, 1
      %p109 = scmp.eq.s32.totalorder %s29, 1
      %p110 = scmp.ne.s32.totalorder %s105, %s107
      %p111 = scmp.eq.s32.totalorder %s29, 0
      %p112 = por %p110, %p111
      %p113 = scmp.ne.s32.totalorder %s105, %s107
      %p114 = scmp.eq.s32.totalorder %s34, 1
      %p115 = por %p113, %p114
      %p116 = scmp.ne.s32.totalorder %s107, %s108
      %p117 = scmp.eq.s32.totalorder %s34, 0
      %p118 = por %p116, %p117
      %p119 = scmp.ne.s32.totalorder %s107, %s108
      %p120 = scmp.eq.s32.totalorder %s35, 1
      %p121 = por %p119, %p120
      %p123 = scmp.ne.s32.totalorder %s108, %s122
      %p124 = scmp.eq.s32.totalorder %s35, 0
      %p125 = por %p123, %p124
      %s127 = sadd.s32 %s126, 1
      %p130 = scmp.eq.s32.totalorder %s29, 1
      %p131 = scmp.ne.s32.totalorder %s126, %s128
      %p132 = scmp.eq.s32.totalorder %s29, 0
      %p133 = por %p131, %p132
      %p134 = scmp.ne.s32.totalorder %s126, %s128
      %p135 = scmp.eq.s32.totalorder %s34, 1
      %p136 = por %p134, %p135
      %p137 = scmp.ne.s32.totalorder %s128, %s129
      %p138 = scmp.eq.s32.totalorder %s34, 0
      %p139 = por %p137, %p138
      %p140 = scmp.ne.s32.totalorder %s128, %s129
      %p141 = scmp.eq.s32.totalorder %s35, 1
      %p142 = por %p140, %p141
      %p144 = scmp.ne.s32.totalorder %s129, %s143
      %p145 = scmp.eq.s32.totalorder %s35, 0
      %p146 = por %p144, %p145
      %s148 = sadd.s32 %s147, 1
      %p151 = scmp.eq.s32.totalorder %s29, 1
      %p152 = scmp.ne.s32.totalorder %s147, %s149
      %p153 = scmp.eq.s32.totalorder %s29, 0
      %p154 = por %p152, %p153
      %p155 = scmp.ne.s32.totalorder %s147, %s149
      %p156 = scmp.eq.s32.totalorder %s34, 1
      %p157 = por %p155, %p156
      %p158 = scmp.ne.s32.totalorder %s149, %s150
      %p159 = scmp.eq.s32.totalorder %s34, 0
      %p160 = por %p158, %p159
      %p161 = scmp.ne.s32.totalorder %s149, %s150
      %p162 = scmp.eq.s32.totalorder %s35, 1
      %p163 = por %p161, %p162
      %p165 = scmp.ne.s32.totalorder %s150, %s164
      %p166 = scmp.eq.s32.totalorder %s35, 0
      %p167 = por %p165, %p166
      %s169 = sadd.s32 %s168, 1
      %p172 = scmp.eq.s32.totalorder %s29, 1
      %p173 = scmp.ne.s32.totalorder %s168, %s170
      %p174 = scmp.eq.s32.totalorder %s29, 0
      %p175 = por %p173, %p174
      %p176 = scmp.ne.s32.totalorder %s168, %s170
      %p177 = scmp.eq.s32.totalorder %s34, 1
      %p178 = por %p176, %p177
      %p179 = scmp.ne.s32.totalorder %s170, %s171
      %p180 = scmp.eq.s32.totalorder %s34, 0
      %p181 = por %p179, %p180
      %p182 = scmp.ne.s32.totalorder %s170, %s171
      %p183 = scmp.eq.s32.totalorder %s35, 1
      %p184 = por %p182, %p183
      %p186 = scmp.ne.s32.totalorder %s171, %s185
      %p187 = scmp.eq.s32.totalorder %s35, 0
      %p188 = por %p186, %p187
      %s190 = sadd.s32 %s189, 1
      %p193 = scmp.eq.s32.totalorder %s29, 1
      %p194 = scmp.ne.s32.totalorder %s189, %s191
      %p195 = scmp.eq.s32.totalorder %s29, 0
      %p196 = por %p194, %p195
      %p197 = scmp.ne.s32.totalorder %s189, %s191
      %p198 = scmp.eq.s32.totalorder %s34, 1
      %p199 = por %p197, %p198
      %p200 = scmp.ne.s32.totalorder %s191, %s192
      %p201 = scmp.eq.s32.totalorder %s34, 0
      %p202 = por %p200, %p201
      %p203 = scmp.ne.s32.totalorder %s191, %s192
      %p204 = scmp.eq.s32.totalorder %s35, 1
      %p205 = por %p203, %p204
      %p207 = scmp.ne.s32.totalorder %s192, %s206
      %p208 = scmp.eq.s32.totalorder %s35, 0
      %p209 = por %p207, %p208
      %s211 = sadd.s32 %s210, 1
      %p214 = scmp.eq.s32.totalorder %s29, 1
      %p215 = scmp.ne.s32.totalorder %s210, %s212
      %p216 = scmp.eq.s32.totalorder %s29, 0
      %p217 = por %p215, %p216
      %p218 = scmp.ne.s32.totalorder %s210, %s212
      %p219 = scmp.eq.s32.totalorder %s34, 1
      %p220 = por %p218, %p219
      %p221 = scmp.ne.s32.totalorder %s212, %s213
      %p222 = scmp.eq.s32.totalorder %s34, 0
      %p223 = por %p221, %p222
      %p224 = scmp.ne.s32.totalorder %s212, %s213
      %p225 = scmp.eq.s32.totalorder %s35, 1
      %p226 = por %p224, %p225
      %p228 = scmp.ne.s32.totalorder %s213, %s227
      %p229 = scmp.eq.s32.totalorder %s35, 0
      %p230 = por %p228, %p229
      %s232 = sadd.s32 %s231, 1
      %p235 = scmp.eq.s32.totalorder %s29, 1
      %p236 = scmp.ne.s32.totalorder %s231, %s233
      %p237 = scmp.eq.s32.totalorder %s29, 0
      %p238 = por %p236, %p237
      %p239 = scmp.ne.s32.totalorder %s231, %s233
      %p240 = scmp.eq.s32.totalorder %s34, 1
      %p241 = por %p239, %p240
      %p242 = scmp.ne.s32.totalorder %s233, %s234
      %p243 = scmp.eq.s32.totalorder %s34, 0
      %p244 = por %p242, %p243
      %p245 = scmp.ne.s32.totalorder %s233, %s234
      %p246 = scmp.eq.s32.totalorder %s35, 1
      %p247 = por %p245, %p246
      %p249 = scmp.ne.s32.totalorder %s234, %s248
      %p250 = scmp.eq.s32.totalorder %s35, 0
      %p251 = por %p249, %p250
      %s253 = sadd.s32 %s252, 1
      %p256 = scmp.eq.s32.totalorder %s29, 1
      %p257 = scmp.ne.s32.totalorder %s252, %s254
      %p258 = scmp.eq.s32.totalorder %s29, 0
      %p259 = por %p257, %p258
      %p260 = scmp.ne.s32.totalorder %s252, %s254
      %p261 = scmp.eq.s32.totalorder %s34, 1
      %p262 = por %p260, %p261
      %p263 = scmp.ne.s32.totalorder %s254, %s255
      %p264 = scmp.eq.s32.totalorder %s34, 0
      %p265 = por %p263, %p264
      %p266 = scmp.ne.s32.totalorder %s254, %s255
      %p267 = scmp.eq.s32.totalorder %s35, 1
      %p268 = por %p266, %p267
      %p270 = scmp.ne.s32.totalorder %s255, %s269
      %p271 = scmp.eq.s32.totalorder %s35, 0
      %p272 = por %p270, %p271
      %s274 = sadd.s32 %s273, 1
      %p277 = scmp.eq.s32.totalorder %s29, 1
      %p278 = scmp.ne.s32.totalorder %s273, %s275
      %p279 = scmp.eq.s32.totalorder %s29, 0
      %p280 = por %p278, %p279
      %p281 = scmp.ne.s32.totalorder %s273, %s275
      %p282 = scmp.eq.s32.totalorder %s34, 1
      %p283 = por %p281, %p282
      %p284 = scmp.ne.s32.totalorder %s275, %s276
      %p285 = scmp.eq.s32.totalorder %s34, 0
      %p286 = por %p284, %p285
      %p287 = scmp.ne.s32.totalorder %s275, %s276
      %p288 = scmp.eq.s32.totalorder %s35, 1
      %p289 = por %p287, %p288
      %p291 = scmp.ne.s32.totalorder %s276, %s290
      %p292 = scmp.eq.s32.totalorder %s35, 0
      %p293 = por %p291, %p292
      %s295 = sadd.s32 %s294, 1
      %p298 = scmp.eq.s32.totalorder %s29, 1
      %p299 = scmp.ne.s32.totalorder %s294, %s296
      %p300 = scmp.eq.s32.totalorder %s29, 0
      %p301 = por %p299, %p300
      %p302 = scmp.ne.s32.totalorder %s294, %s296
      %p303 = scmp.eq.s32.totalorder %s34, 1
      %p304 = por %p302, %p303
      %p305 = scmp.ne.s32.totalorder %s296, %s297
      %p306 = scmp.eq.s32.totalorder %s34, 0
      %p307 = por %p305, %p306
      %p308 = scmp.ne.s32.totalorder %s296, %s297
      %p309 = scmp.eq.s32.totalorder %s35, 1
      %p310 = por %p308, %p309
      %p312 = scmp.ne.s32.totalorder %s297, %s311
      %p313 = scmp.eq.s32.totalorder %s35, 0
      %p314 = por %p312, %p313
      %s316 = sadd.s32 %s315, 1
      %p319 = scmp.eq.s32.totalorder %s29, 1
      %p320 = scmp.ne.s32.totalorder %s315, %s317
      %p321 = scmp.eq.s32.totalorder %s29, 0
      %p322 = por %p320, %p321
      %p323 = scmp.ne.s32.totalorder %s315, %s317
      %p324 = scmp.eq.s32.totalorder %s34, 1
      %p325 = por %p323, %p324
      %p326 = scmp.ne.s32.totalorder %s317, %s318
      %p327 = scmp.eq.s32.totalorder %s34, 0
      %p328 = por %p326, %p327
      %p329 = scmp.ne.s32.totalorder %s317, %s318
      %p330 = scmp.eq.s32.totalorder %s35, 1
      %p331 = por %p329, %p330
      %p333 = scmp.ne.s32.totalorder %s318, %s332
      %p334 = scmp.eq.s32.totalorder %s35, 0
      %p335 = por %p333, %p334
      %s336 = ssub.s32 %s29, %s36
      %p337 = scmp.eq.s32.totalorder %s336, 0
      %s339 = sadd.s32 %s338, 1
      %s340 = scalar_select %p337, %s338, %s339
      %p343 = pneg %p337
      %p344 = scmp.eq.s32.totalorder %s29, 1
      %p345 = por %p343, %p344
      %p346 = scmp.ne.s32.totalorder %s338, %s341
      %p347 = scmp.eq.s32.totalorder %s29, 0
      %p348 = por %p346, %p347
      %p349 = scmp.ne.s32.totalorder %s338, %s341
      %p350 = scmp.eq.s32.totalorder %s34, 1
      %p351 = por %p349, %p350
      %p352 = scmp.ne.s32.totalorder %s341, %s342
      %p353 = scmp.eq.s32.totalorder %s34, 0
      %p354 = por %p352, %p353
      %p355 = scmp.ne.s32.totalorder %s341, %s342
      %p356 = scmp.eq.s32.totalorder %s35, 1
      %p357 = por %p355, %p356
      %p359 = scmp.ne.s32.totalorder %s342, %s358
      %p360 = scmp.eq.s32.totalorder %s35, 0
      %p361 = por %p359, %p360
      %p362 = scmp.le.s32.totalorder 1, %s29
      %p363 = scmp.lt.s32.totalorder %s29, 3
      %p364 = pnand %p362, %p363
      %p365 = pneg %p364
      // Predicated region
      $region9: #{tpu_custom_call.1} parent=5 // pred_check
        _
      $region10: #{tpu_custom_call.1} parent=5 // pred_check_branch
        %367 = sbr.rel (%p364) target = $region12
      $region11: #{tpu_custom_call.1} parent=5 // pred_region
        %s368 = ssub.s32 %s29, 1
        // Predicated region
        $region13: #{tpu_custom_call.1} parent=11 // pred_check
          %p369 = pneg %p76
        $region14: #{tpu_custom_call.1} parent=11 // pred_check_branch
          %371 = sbr.rel (%p369) target = $region16
        $region15: #{tpu_custom_call.1} parent=11 // pred_region
          %s373 = ssub.s32 64, 64
          %374 = vsyncadd [#allocation6], %s373
          %s376 = sshll.u32 [#allocation5], 4
          %s377 = int_to_ptr.vmem [resolvable:$true] %s376
          %379 = dma.hbm_to_vmem [thread:$0]  %s1, 64, %s377, [#allocation6]
        $region16: #{tpu_custom_call.1} parent=11 // pred_fallthru
          _
        // Predicated region
        $region17: #{tpu_custom_call.1} parent=11 // pred_check
          %p380 = pneg %p97
        $region18: #{tpu_custom_call.1} parent=11 // pred_check_branch
          %382 = sbr.rel (%p380) target = $region20
        $region19: #{tpu_custom_call.1} parent=11 // pred_region
          %s384 = ssub.s32 512, 512
          %385 = vsyncadd [#allocation6], %s384
          %s386 = sshll.u32 [#allocation7], 4
          %s387 = int_to_ptr.vmem [resolvable:$true] %s386
          %392 = dma.hbm_to_vmem [thread:$0]  %s2, 512, %s387, [#allocation6], 128, 128, 8
        $region20: #{tpu_custom_call.1} parent=11 // pred_fallthru
          _
        // Predicated region
        $region21: #{tpu_custom_call.1} parent=11 // pred_check
          %p393 = pneg %p118
        $region22: #{tpu_custom_call.1} parent=11 // pred_check_branch
          %395 = sbr.rel (%p393) target = $region24
        $region23: #{tpu_custom_call.1} parent=11 // pred_region
          %s397 = ssub.s32 64, 64
          %398 = vsyncadd [#allocation9], %s397
          %s400 = sshll.u32 [#allocation8], 4
          %s401 = int_to_ptr.vmem [resolvable:$true] %s400
          %403 = dma.hbm_to_vmem [thread:$0]  %s3, 64, %s401, [#allocation9]
        $region24: #{tpu_custom_call.1} parent=11 // pred_fallthru
          _
        // Predicated region
        $region25: #{tpu_custom_call.1} parent=11 // pred_check
          %p404 = pneg %p139
        $region26: #{tpu_custom_call.1} parent=11 // pred_check_branch
          %406 = sbr.rel (%p404) target = $region28
        $region27: #{tpu_custom_call.1} parent=11 // pred_region
          _
        $region28: #{tpu_custom_call.1} parent=11 // pred_fallthru
          _
        // Predicated region
        $region29: #{tpu_custom_call.1} parent=11 // pred_check
          %p407 = pneg %p160
        $region30: #{tpu_custom_call.1} parent=11 // pred_check_branch
          %409 = sbr.rel (%p407) target = $region32
        $region31: #{tpu_custom_call.1} parent=11 // pred_region
          %s411 = ssub.s32 32, 32
          %412 = vsyncadd [#allocation9], %s411
          %s414 = sshll.u32 [#allocation10], 4
          %s415 = int_to_ptr.vmem [resolvable:$true] %s414
          %417 = dma.hbm_to_vmem [thread:$0]  %s5, 32, %s415, [#allocation9]
        $region32: #{tpu_custom_call.1} parent=11 // pred_fallthru
          _
        // Predicated region
        $region33: #{tpu_custom_call.1} parent=11 // pred_check
          %p418 = pneg %p181
        $region34: #{tpu_custom_call.1} parent=11 // pred_check_branch
          %420 = sbr.rel (%p418) target = $region36
        $region35: #{tpu_custom_call.1} parent=11 // pred_region
          _
        $region36: #{tpu_custom_call.1} parent=11 // pred_fallthru
          _
        // Predicated region
        $region37: #{tpu_custom_call.1} parent=11 // pred_check
          %p421 = pneg %p202
        $region38: #{tpu_custom_call.1} parent=11 // pred_check_branch
          %423 = sbr.rel (%p421) target = $region40
        $region39: #{tpu_custom_call.1} parent=11 // pred_region
          _
        $region40: #{tpu_custom_call.1} parent=11 // pred_fallthru
          _
        // Predicated region
        $region41: #{tpu_custom_call.1} parent=11 // pred_check
          %p424 = pneg %p223
        $region42: #{tpu_custom_call.1} parent=11 // pred_check_branch
          %426 = sbr.rel (%p424) target = $region44
        $region43: #{tpu_custom_call.1} parent=11 // pred_region
          %s428 = ssub.s32 256, 256
          %429 = vsyncadd [#allocation12], %s428
          %s430 = sshll.u32 [#allocation11], 4
          %s431 = int_to_ptr.vmem [resolvable:$true] %s430
          %436 = dma.hbm_to_vmem [thread:$0]  %s8, 256, %s431, [#allocation12], 128, 128, 8
        $region44: #{tpu_custom_call.1} parent=11 // pred_fallthru
          _
        // Predicated region
        $region45: #{tpu_custom_call.1} parent=11 // pred_check
          %p437 = pneg %p244
        $region46: #{tpu_custom_call.1} parent=11 // pred_check_branch
          %439 = sbr.rel (%p437) target = $region48
        $region47: #{tpu_custom_call.1} parent=11 // pred_region
          _
        $region48: #{tpu_custom_call.1} parent=11 // pred_fallthru
          _
        // Predicated region
        $region49: #{tpu_custom_call.1} parent=11 // pred_check
          %p440 = pneg %p265
        $region50: #{tpu_custom_call.1} parent=11 // pred_check_branch
          %442 = sbr.rel (%p440) target = $region52
        $region51: #{tpu_custom_call.1} parent=11 // pred_region
          _
        $region52: #{tpu_custom_call.1} parent=11 // pred_fallthru
          _
        // Predicated region
        $region53: #{tpu_custom_call.1} parent=11 // pred_check
          %p443 = pneg %p286
        $region54: #{tpu_custom_call.1} parent=11 // pred_check_branch
          %445 = sbr.rel (%p443) target = $region56
        $region55: #{tpu_custom_call.1} parent=11 // pred_region
          _
        $region56: #{tpu_custom_call.1} parent=11 // pred_fallthru
          _
        // Predicated region
        $region57: #{tpu_custom_call.1} parent=11 // pred_check
          %p446 = pneg %p307
        $region58: #{tpu_custom_call.1} parent=11 // pred_check_branch
          %448 = sbr.rel (%p446) target = $region60
        $region59: #{tpu_custom_call.1} parent=11 // pred_region
          _
        $region60: #{tpu_custom_call.1} parent=11 // pred_fallthru
          _
        // Predicated region
        $region61: #{tpu_custom_call.1} parent=11 // pred_check
          %p449 = pneg %p328
        $region62: #{tpu_custom_call.1} parent=11 // pred_check_branch
          %451 = sbr.rel (%p449) target = $region64
        $region63: #{tpu_custom_call.1} parent=11 // pred_region
          _
        $region64: #{tpu_custom_call.1} parent=11 // pred_fallthru
          _
      $region12: #{tpu_custom_call.1} parent=5 // pred_fallthru
        _
      %p452 = scmp.lt.s32.totalorder %s29, 2
      // Predicated region
      $region65: #{tpu_custom_call.1} parent=5 // pred_check
        %p453 = pneg %p452
      $region66: #{tpu_custom_call.1} parent=5 // pred_check_branch
        %455 = sbr.rel (%p453) target = $region68
      $region67: #{tpu_custom_call.1} parent=5 // pred_region
        // Predicated region
        $region69: #{tpu_custom_call.1} parent=67 // pred_check
          %p456 = pneg %p49
        $region70: #{tpu_custom_call.1} parent=67 // pred_check_branch
          %458 = sbr.rel (%p456) target = $region72
        $region71: #{tpu_custom_call.1} parent=67 // pred_region
          %s459 = sand.u32 %s39, 1
          %s460 = scalar_lea.sflag [#allocation3], %s459
          %s461 = sand.u32 %s39, 1
          %s462 = smul.addr %s461, 8
          %s463 = scalar_lea.vmem [#allocation2], %s462
          %s465 = ssub.s32 128, 128
          %466 = vsyncadd %s460, %s465
          %s467 = smul.addr %s29, 128
          %s468 = scalar_lea.hbm %s0, %s467
          %s470 = sshll.u32 %s463, 4
          %s471 = int_to_ptr.vmem [resolvable:$true] %s470
          %473 = dma.hbm_to_vmem [thread:$0]  %s468, 128, %s471, %s460
        $region72: #{tpu_custom_call.1} parent=67 // pred_fallthru
          _
      $region68: #{tpu_custom_call.1} parent=5 // pred_fallthru
        _
      %p474 = scmp.le.s32.totalorder 1, %s29
      %p475 = scmp.lt.s32.totalorder %s29, 3
      %p476 = pnand %p474, %p475
      %p477 = pneg %p476
      // Predicated region
      $region73: #{tpu_custom_call.1} parent=5 // pred_check
        _
      $region74: #{tpu_custom_call.1} parent=5 // pred_check_branch
        %479 = sbr.rel (%p476) target = $region76
      $region75: #{tpu_custom_call.1} parent=5 // pred_region
        %s480 = ssub.s32 %s29, 1
        %s481 = sand.u32 %s42, 1
        %s482 = scalar_lea.sflag [#allocation3], %s481
        %s483 = sand.u32 %s42, 1
        %s484 = smul.addr %s483, 8
        %s485 = scalar_lea.vmem [#allocation2], %s484
        // Predicated region
        $region77: #{tpu_custom_call.1} parent=75 // pred_check
          %p486 = pneg %p55
        $region78: #{tpu_custom_call.1} parent=75 // pred_check_branch
          %488 = sbr.rel (%p486) target = $region80
        $region79: #{tpu_custom_call.1} parent=75 // pred_region
          %489 = dma.done %s482, 128
        $region80: #{tpu_custom_call.1} parent=75 // pred_fallthru
          _
        // Predicated region
        $region81: #{tpu_custom_call.1} parent=75 // pred_check
          %p490 = pneg %p76
        $region82: #{tpu_custom_call.1} parent=75 // pred_check_branch
          %492 = sbr.rel (%p490) target = $region84
        $region83: #{tpu_custom_call.1} parent=75 // pred_region
          %493 = dma.done [#allocation6], 64
        $region84: #{tpu_custom_call.1} parent=75 // pred_fallthru
          _
        // Predicated region
        $region85: #{tpu_custom_call.1} parent=75 // pred_check
          %p494 = pneg %p97
        $region86: #{tpu_custom_call.1} parent=75 // pred_check_branch
          %496 = sbr.rel (%p494) target = $region88
        $region87: #{tpu_custom_call.1} parent=75 // pred_region
          %497 = dma.done [#allocation6], 512
        $region88: #{tpu_custom_call.1} parent=75 // pred_fallthru
          _
        // Predicated region
        $region89: #{tpu_custom_call.1} parent=75 // pred_check
          %p498 = pneg %p118
        $region90: #{tpu_custom_call.1} parent=75 // pred_check_branch
          %500 = sbr.rel (%p498) target = $region92
        $region91: #{tpu_custom_call.1} parent=75 // pred_region
          %501 = dma.done [#allocation9], 64
        $region92: #{tpu_custom_call.1} parent=75 // pred_fallthru
          _
        // Predicated region
        $region93: #{tpu_custom_call.1} parent=75 // pred_check
          %p502 = pneg %p160
        $region94: #{tpu_custom_call.1} parent=75 // pred_check_branch
          %504 = sbr.rel (%p502) target = $region96
        $region95: #{tpu_custom_call.1} parent=75 // pred_region
          %505 = dma.done [#allocation9], 32
        $region96: #{tpu_custom_call.1} parent=75 // pred_fallthru
          _
        // Predicated region
        $region97: #{tpu_custom_call.1} parent=75 // pred_check
          %p506 = pneg %p223
        $region98: #{tpu_custom_call.1} parent=75 // pred_check_branch
          %508 = sbr.rel (%p506) target = $region100
        $region99: #{tpu_custom_call.1} parent=75 // pred_region
          %509 = dma.done [#allocation12], 256
        $region100: #{tpu_custom_call.1} parent=75 // pred_fallthru
          _
        %s510 = sand.u32 %s42, 1
        %s511 = scalar_lea.sflag [#allocation3], %s510
        %s512 = sand.u32 %s42, 1
        %s513 = smul.addr %s512, 8
        %s514 = scalar_lea.vmem [#allocation2], %s513
        %p515 = pneg %p55
        %p516 = pneg %p52
        %p517 = pneg %p76
        %p518 = pneg %p73
        %p519 = pneg %p97
        %p520 = pneg %p94
        %p521 = pneg %p118
        %p522 = pneg %p115
        %p523 = pneg %p139
        %p524 = pneg %p136
        %p525 = pneg %p160
        %p526 = pneg %p157
        %p527 = pneg %p181
        %p528 = pneg %p178
        %p529 = pneg %p202
        %p530 = pneg %p199
        %p531 = pneg %p223
        %p532 = pneg %p220
        %p533 = pneg %p244
        %p534 = pneg %p241
        %p535 = pneg %p265
        %p536 = pneg %p262
        %p537 = pneg %p286
        %p538 = pneg %p283
        %p539 = pneg %p307
        %p540 = pneg %p304
        %p541 = pneg %p328
        %p542 = pneg %p325
        %p543 = pneg %p354
        %p544 = pneg %p351
        %s545 = sand.u32 %s341, 1
        %s546 = scalar_lea.sflag [#allocation4], %s545
        %s547 = sand.u32 %s341, 1
        %s548 = smul.addr %s547, 8
        %s549 = scalar_lea.vmem [#allocation13], %s548
        %v550 = vld [vmem:[%s485] sm:$0xff]
        %v551 = vld [vmem:[#allocation5] sm:$0x1]
        %v552 = vld [vmem:[#allocation5 + $0x1] sm:$0x1]
        %v553 = vld [vmem:[#allocation5 + $0x2] sm:$0x1]
        %v554 = vld [vmem:[#allocation8] sm:$0x1]
        %v555 = vld [vmem:[#allocation8 + $0x1] sm:$0x1]
        %v556 = vld [vmem:[#allocation8 + $0x2] sm:$0x1]
        %v557 = vld [vmem:[#allocation8 + $0x3] sm:$0x1]
        %vm558 = vcmask 261120
        %v559 = vsel %vm558, %v550, 0.0
        %560 = vadd.xlane.f32.xlu0 %v559
        %v561 = vpop.xlane.xlu0 %560
        %v562 = vrcp.pop 32.0
        %v563 = vmul.f32 %v561, %v562
        %v564 = vsub.f32 %v550, %v563
        %v565 = vmul.f32 %v564, %v564
        %v566 = vsel %vm558, %v565, 0.0
        %567 = vadd.xlane.f32.xlu0 %v566
        %v568 = vpop.xlane.xlu0 %567
        %v569 = vmul.f32 %v568, %v562
        %v570 = vadd.f32 %v569, 1e-05
        %v571 = vrsqrt.pop %v570
        %v572 = vmul.f32 %v564, %v571
        %v573 = vlaneseq
        %v574 = vshrl.u32 %v573, 7
        %v575 = vsub.s32 0, %v574
        %v576 = vrot.slane %v551, %v575
        %v577 = vmul.f32 %v572, %v576
        %v578 = vlaneseq
        %v579 = vshrl.u32 %v578, 7
        %v580 = vsub.s32 0, %v579
        %v581 = vrot.slane %v552, %v580
        %v582 = vadd.f32 %v577, %v581
        %v583 = vld [vmem:[#allocation7] sm:$0xff]
        %v584 = vld [vmem:[#allocation7 + $0x8] sm:$0xff]
        %v585 = vld [vmem:[#allocation7 + $0x10] sm:$0xff]
        %v586 = vld [vmem:[#allocation7 + $0x18] sm:$0xff]
        %v587 = vlaneseq
        %v588 = vshrl.u32 %v587, 7
        %v589 = vsub.s32 0, %v588
        %v590 = vrot.slane %v556, %v589
        %v592 = vsel %vm558, %v582, 0
        %594 = vmatprep.subr.mxu0 0.0
        %595 = vmatpush1.msra.mxu0 %v583
        %596 = vmatprep.subr.mxu0 0.0
        %597 = vmatpush1.msra.mxu0 %v584
        %598 = vmatprep.subr.mxu0 0.0
        %599 = vmatpush1.msra.mxu0 %v585
        %600 = vmatprep.subr.mxu0 0.0
        %601 = vmatpush1.msra.mxu0 %v586
        %602 = vmatprep.subr.mxu0 0.0
        %603 = vmatpush1.msra.mxu0 0.0
        %604 = vmatprep.subr.mxu0 0.0
        %605 = vmatpush1.msra.mxu0 0.0
        %606 = vmatprep.subr.mxu0 0.0
        %607 = vmatpush1.msra.mxu0 0.0
        %608 = vmatprep.subr.mxu0 0.0
        %609 = vmatpush1.msra.mxu0 0.0
        %610 = vmatprep.subr.mxu0 0.0
        %611 = vmatpush1.msra.mxu0 0.0
        %612 = vmatprep.subr.mxu0 0.0
        %613 = vmatpush1.msra.mxu0 0.0
        %614 = vmatprep.subr.mxu0 0.0
        %615 = vmatpush1.msra.mxu0 0.0
        %616 = vmatprep.subr.mxu0 0.0
        %617 = vmatpush1.msra.mxu0 0.0
        %618 = vmatprep.subr.mxu0 0.0
        %619 = vmatpush1.msra.mxu0 0.0
        %620 = vmatprep.subr.mxu0 0.0
        %621 = vmatpush1.msra.mxu0 0.0
        %622 = vmatprep.subr.mxu0 0.0
        %623 = vmatpush1.msra.mxu0 0.0
        %624 = vmatprep.subr.mxu0 0.0
        %625 = vmatpush1.msra.mxu0 0.0
        %626 = vmatprep.subr.mxu0 0.0
        %627 = vmatpush1.msra.mxu0 0.0
        %628 = vmatprep.subr.mxu0 0.0
        %629 = vmatpush1.msra.mxu0 0.0
        %630 = vmatprep.subr.mxu0 0.0
        %631 = vmatpush1.msra.mxu0 0.0
        %632 = vmatprep.subr.mxu0 0.0
        %633 = vmatpush1.msra.mxu0 0.0
        %634 = vmatprep.subr.mxu0 0.0
        %635 = vmatpush1.msra.mxu0 0.0
        %636 = vmatprep.subr.mxu0 0.0
        %637 = vmatpush1.msra.mxu0 0.0
        %638 = vmatprep.subr.mxu0 0.0
        %639 = vmatpush1.msra.mxu0 0.0
        %640 = vmatprep.subr.mxu0 0.0
        %641 = vmatpush1.msra.mxu0 0.0
        %642 = vmatprep.subr.mxu0 0.0
        %643 = vmatpush1.msra.mxu0 0.0
        %644 = vmatprep.subr.mxu0 0.0
        %645 = vmatpush1.msra.mxu0 0.0
        %646 = vmatprep.subr.mxu0 0.0
        %647 = vmatpush1.msra.mxu0 0.0
        %648 = vmatprep.subr.mxu0 0.0
        %649 = vmatpush1.msra.mxu0 0.0
        %650 = vmatprep.subr.mxu0 0.0
        %651 = vmatpush1.msra.mxu0 0.0
        %652 = vmatprep.subr.mxu0 0.0
        %653 = vmatpush1.msra.mxu0 0.0
        %654 = vmatprep.subr.mxu0 0.0
        %655 = vmatpush1.msra.mxu0 0.0
        %656 = vmatprep.subr.mxu0 0.0
        %657 = vmatpush1.msra.mxu0 0.0
        %658 = vmatprep.mubr.f32.mxu0 0.0
        %659 = vmatmul.mubr.f32.gmra.mrb[0].mxu0 %v592
        %v660 = vpop.f32.mrb[0].mxu0
        %v661 = vadd.f32 %v590, %v660
        %v662 = vpop.f32.mrb[0].mxu0
        %663 = vdwg.mxu0
        %v664 = vmul.f32 %v661, 0.5
        %v665 = vmul.f32 %v661, 0.70710677
        %v666 = verf.f32.pop %v665
        %v667 = vadd.f32 %v666, 1.0
        %v668 = vmul.f32 %v664, %v667
        %vm669 = vcmask 523264
        %v670 = vsel %vm669, %v668, 0.0
        %671 = vadd.xlane.f32.xlu0 %v670
        %v672 = vpop.xlane.xlu0 %671
        %v673 = vrcp.pop 64.0
        %v674 = vmul.f32 %v672, %v673
        %v675 = vsub.f32 %v668, %v674
        %v676 = vmul.f32 %v675, %v675
        %v677 = vsel %vm669, %v676, 0.0
        %678 = vadd.xlane.f32.xlu0 %v677
        %v679 = vpop.xlane.xlu0 %678
        %v680 = vmul.f32 %v679, %v673
        %v681 = vadd.f32 %v680, 1e-05
        %v682 = vrsqrt.pop %v681
        %v683 = vmul.f32 %v675, %v682
        %v684 = vlaneseq
        %v685 = vshrl.u32 %v684, 7
        %v686 = vsub.s32 0, %v685
        %v687 = vrot.slane %v554, %v686
        %v688 = vmul.f32 %v683, %v687
        %v689 = vlaneseq
        %v690 = vshrl.u32 %v689, 7
        %v691 = vsub.s32 0, %v690
        %v692 = vrot.slane %v555, %v691
        %v693 = vadd.f32 %v688, %v692
        %v694 = vld [vmem:[%s10] sm:$0xff]
        %v695 = vld [vmem:[%s10 + $0x8] sm:$0xff]
        %v696 = vld [vmem:[%s10 + $0x10] sm:$0xff]
        %v697 = vld [vmem:[%s10 + $0x18] sm:$0xff]
        %v698 = vld [vmem:[%s10 + $0x20] sm:$0xff]
        %v699 = vld [vmem:[%s10 + $0x28] sm:$0xff]
        %v700 = vld [vmem:[%s10 + $0x30] sm:$0xff]
        %v701 = vld [vmem:[%s10 + $0x38] sm:$0xff]
        %v702 = vld [vmem:[%s11] sm:$0x1]
        %v703 = vlaneseq
        %v704 = vshrl.u32 %v703, 7
        %v705 = vsub.s32 0, %v704
        %v706 = vrot.slane %v702, %v705
        %v708 = vsel %vm669, %v693, 0
        %710 = vmatprep.subr.mxu0 0.0
        %711 = vmatpush1.msra.mxu0 %v694
        %712 = vmatprep.subr.mxu0 0.0
        %713 = vmatpush1.msra.mxu0 %v695
        %714 = vmatprep.subr.mxu0 0.0
        %715 = vmatpush1.msra.mxu0 %v696
        %716 = vmatprep.subr.mxu0 0.0
        %717 = vmatpush1.msra.mxu0 %v697
        %718 = vmatprep.subr.mxu0 0.0
        %719 = vmatpush1.msra.mxu0 %v698
        %720 = vmatprep.subr.mxu0 0.0
        %721 = vmatpush1.msra.mxu0 %v699
        %722 = vmatprep.subr.mxu0 0.0
        %723 = vmatpush1.msra.mxu0 %v700
        %724 = vmatprep.subr.mxu0 0.0
        %725 = vmatpush1.msra.mxu0 %v701
        %726 = vmatprep.subr.mxu0 0.0
        %727 = vmatpush1.msra.mxu0 0.0
        %728 = vmatprep.subr.mxu0 0.0
        %729 = vmatpush1.msra.mxu0 0.0
        %730 = vmatprep.subr.mxu0 0.0
        %731 = vmatpush1.msra.mxu0 0.0
        %732 = vmatprep.subr.mxu0 0.0
        %733 = vmatpush1.msra.mxu0 0.0
        %734 = vmatprep.subr.mxu0 0.0
        %735 = vmatpush1.msra.mxu0 0.0
        %736 = vmatprep.subr.mxu0 0.0
        %737 = vmatpush1.msra.mxu0 0.0
        %738 = vmatprep.subr.mxu0 0.0
        %739 = vmatpush1.msra.mxu0 0.0
        %740 = vmatprep.subr.mxu0 0.0
        %741 = vmatpush1.msra.mxu0 0.0
        %742 = vmatprep.subr.mxu0 0.0
        %743 = vmatpush1.msra.mxu0 0.0
        %744 = vmatprep.subr.mxu0 0.0
        %745 = vmatpush1.msra.mxu0 0.0
        %746 = vmatprep.subr.mxu0 0.0
        %747 = vmatpush1.msra.mxu0 0.0
        %748 = vmatprep.subr.mxu0 0.0
        %749 = vmatpush1.msra.mxu0 0.0
        %750 = vmatprep.subr.mxu0 0.0
        %751 = vmatpush1.msra.mxu0 0.0
        %752 = vmatprep.subr.mxu0 0.0
        %753 = vmatpush1.msra.mxu0 0.0
        %754 = vmatprep.subr.mxu0 0.0
        %755 = vmatpush1.msra.mxu0 0.0
        %756 = vmatprep.subr.mxu0 0.0
        %757 = vmatpush1.msra.mxu0 0.0
        %758 = vmatprep.subr.mxu0 0.0
        %759 = vmatpush1.msra.mxu0 0.0
        %760 = vmatprep.subr.mxu0 0.0
        %761 = vmatpush1.msra.mxu0 0.0
        %762 = vmatprep.subr.mxu0 0.0
        %763 = vmatpush1.msra.mxu0 0.0
        %764 = vmatprep.subr.mxu0 0.0
        %765 = vmatpush1.msra.mxu0 0.0
        %766 = vmatprep.subr.mxu0 0.0
        %767 = vmatpush1.msra.mxu0 0.0
        %768 = vmatprep.subr.mxu0 0.0
        %769 = vmatpush1.msra.mxu0 0.0
        %770 = vmatprep.subr.mxu0 0.0
        %771 = vmatpush1.msra.mxu0 0.0
        %772 = vmatprep.subr.mxu0 0.0
        %773 = vmatpush1.msra.mxu0 0.0
        %774 = vmatprep.mubr.f32.mxu0 0.0
        %775 = vmatmul.mubr.f32.gmra.mrb[0].mxu0 %v708
        %v776 = vpop.f32.mrb[0].mxu0
        %v777 = vadd.f32 %v706, %v776
        %v778 = vpop.f32.mrb[0].mxu0
        %779 = vdwg.mxu0
        %v780 = vmul.f32 %v777, 0.5
        %v781 = vmul.f32 %v777, 0.70710677
        %v782 = verf.f32.pop %v781
        %v783 = vadd.f32 %v782, 1.0
        %v784 = vmul.f32 %v780, %v783
        %v785 = vld [vmem:[%s12] sm:$0xff]
        %787 = vset.pattern.permute.xlu0 0
        %788 = vperm.xlu0 %787, %v785
        %v789 = vpop.permute.xlu0 %788
        %v791 = vmul.f32 %v784, %v789
        %vm792 = vcmask 80896
        %v793 = vsel %vm792, %v791, 0.0
        %v794 = vrot.slane %v793, 4
        %v795 = vadd.f32 %v793, %v794
        %v796 = vrot.slane %v795, 2
        %v797 = vadd.f32 %v795, %v796
        %v798 = vrot.slane %v797, 1
        %v799 = vadd.f32 %v797, %v798
        %v800 = vld [vmem:[%s13] sm:$0x1]
        %802 = vset.pattern.permute.xlu0 0
        %803 = vperm.xlu0 %802, %v800
        %v804 = vpop.permute.xlu0 %803
        %v806 = vlaneseq
        %v807 = vshrl.u32 %v806, 7
        %v808 = vsub.s32 0, %v807
        %v809 = vrot.slane %v804, %v808
        %v810 = vadd.f32 %v799, %v809
        %v811 = vmul.f32 %v810, 0.5
        %v812 = vmul.f32 %v810, 0.70710677
        %v813 = verf.f32.pop %v812
        %v814 = vadd.f32 %v813, 1.0
        %v815 = vmul.f32 %v811, %v814
        %v816 = vld [vmem:[%s11 + $0x1] sm:$0x1]
        %v817 = vmul.f32 %v815, %v816
        %vm818 = vcmask 73728
        %v819 = vsel %vm818, %v817, 0.0
        %820 = vadd.xlane.f32.xlu0 %v819
        %v821 = vpop.xlane.xlu0 %820
        %v822 = vlaneseq
        %v823 = vshrl.u32 %v822, 7
        %v824 = vsub.s32 0, %v823
        %v825 = vrot.slane %v800, %v824
        %826 = vrot.lane.b32.xlu0 %v825, 127
        %v827 = vpop.permute.xlu0 %826
        %v829 = vadd.f32 %v821, %v827
        %v830 = vsub.f32 0.0, %v829
        %v831 = vmul.f32 %v830, 1.442695
        %v832 = vpow.pop %v831
        %v833 = vadd.f32 %v832, 1.0
        %v834 = vrcp.pop %v833
        %v835 = vmul.f32 1.0, %v834
        %vm836 = vcmp.le.f32.partialorder %v835, 0.5
        %v837 = vld [vmem:[#allocation11] sm:$0xff]
        %v838 = vld [vmem:[#allocation11 + $0x8] sm:$0xff]
        %v839 = vld [vmem:[%s9] sm:$0xff]
        %v840 = vld [vmem:[%s9 + $0x8] sm:$0xff]
        %v841 = vsel %vm836, 1, 0
        %s842 = vtos %v841
        %v843 = vstv %s842
        %vm844 = vcmp.eq.s32.totalorder %v843, 1
        %v845 = vsel %vm844, %v837, %v838
        %v846 = vlaneseq
        %v847 = vshrl.u32 %v846, 7
        %v848 = vsub.s32 0, %v847
        %v849 = vrot.slane %v841, %v848
        %vm850 = vcmp.eq.s32.totalorder %v849, 1
        %v851 = vsel %vm850, %v839, %v840
        %853 = vset.pattern.permute.xlu0 0
        %854 = vperm.xlu0 %853, %v851
        %v855 = vpop.permute.xlu0 %854
        %vm857 = vcmask 64512
        %v859 = vsel %vm857, %v845, 0
        %861 = vmatprep.subr.mxu0 0.0
        %862 = vmatpush1.msra.mxu0 %v693
        %863 = vmatprep.subr.mxu0 0.0
        %864 = vmatpush1.msra.mxu0 0.0
        %865 = vmatprep.subr.mxu0 0.0
        %866 = vmatpush1.msra.mxu0 0.0
        %867 = vmatprep.subr.mxu0 0.0
        %868 = vmatpush1.msra.mxu0 0.0
        %869 = vmatprep.subr.mxu0 0.0
        %870 = vmatpush1.msra.mxu0 0.0
        %871 = vmatprep.subr.mxu0 0.0
        %872 = vmatpush1.msra.mxu0 0.0
        %873 = vmatprep.subr.mxu0 0.0
        %874 = vmatpush1.msra.mxu0 0.0
        %875 = vmatprep.subr.mxu0 0.0
        %876 = vmatpush1.msra.mxu0 0.0
        %877 = vmatprep.subr.mxu0 0.0
        %878 = vmatpush1.msra.mxu0 0.0
        %879 = vmatprep.subr.mxu0 0.0
        %880 = vmatpush1.msra.mxu0 0.0
        %881 = vmatprep.subr.mxu0 0.0
        %882 = vmatpush1.msra.mxu0 0.0
        %883 = vmatprep.subr.mxu0 0.0
        %884 = vmatpush1.msra.mxu0 0.0
        %885 = vmatprep.subr.mxu0 0.0
        %886 = vmatpush1.msra.mxu0 0.0
        %887 = vmatprep.subr.mxu0 0.0
        %888 = vmatpush1.msra.mxu0 0.0
        %889 = vmatprep.subr.mxu0 0.0
        %890 = vmatpush1.msra.mxu0 0.0
        %891 = vmatprep.subr.mxu0 0.0
        %892 = vmatpush1.msra.mxu0 0.0
        %893 = vmatprep.subr.mxu0 0.0
        %894 = vmatpush1.msra.mxu0 0.0
        %895 = vmatprep.subr.mxu0 0.0
        %896 = vmatpush1.msra.mxu0 0.0
        %897 = vmatprep.subr.mxu0 0.0
        %898 = vmatpush1.msra.mxu0 0.0
        %899 = vmatprep.subr.mxu0 0.0
        %900 = vmatpush1.msra.mxu0 0.0
        %901 = vmatprep.subr.mxu0 0.0
        %902 = vmatpush1.msra.mxu0 0.0
        %903 = vmatprep.subr.mxu0 0.0
        %904 = vmatpush1.msra.mxu0 0.0
        %905 = vmatprep.subr.mxu0 0.0
        %906 = vmatpush1.msra.mxu0 0.0
        %907 = vmatprep.subr.mxu0 0.0
        %908 = vmatpush1.msra.mxu0 0.0
        %909 = vmatprep.subr.mxu0 0.0
        %910 = vmatpush1.msra.mxu0 0.0
        %911 = vmatprep.subr.mxu0 0.0
        %912 = vmatpush1.msra.mxu0 0.0
        %913 = vmatprep.subr.mxu0 0.0
        %914 = vmatpush1.msra.mxu0 0.0
        %915 = vmatprep.subr.mxu0 0.0
        %916 = vmatpush1.msra.mxu0 0.0
        %917 = vmatprep.subr.mxu0 0.0
        %918 = vmatpush1.msra.mxu0 0.0
        %919 = vmatprep.subr.mxu0 0.0
        %920 = vmatpush1.msra.mxu0 0.0
        %921 = vmatprep.subr.mxu0 0.0
        %922 = vmatpush1.msra.mxu0 0.0
        %923 = vmatprep.subr.mxu0 0.0
        %924 = vmatpush1.msra.mxu0 0.0
        %925 = vmatprep.mubr.f32.mxu0 0.0
        %926 = vmatmul.mubr.f32.gmra.mrb[0].mxu0 %v859
        %v927 = vpop.f32.mrb[0].mxu0
        %v928 = vadd.f32 %v855, %v927
        %v929 = vpop.f32.mrb[0].mxu0
        %930 = vdwg.mxu0
        %v931 = vld [vmem:[%s4] sm:$0xff]
        %v932 = vld [vmem:[%s4 + $0x8] sm:$0xff]
        %v933 = vld [vmem:[%s4 + $0x10] sm:$0xff]
        %v934 = vld [vmem:[%s4 + $0x18] sm:$0xff]
        %v935 = vld [vmem:[%s4 + $0x20] sm:$0xff]
        %v936 = vld [vmem:[%s4 + $0x28] sm:$0xff]
        %v937 = vld [vmem:[%s4 + $0x30] sm:$0xff]
        %v938 = vld [vmem:[%s4 + $0x38] sm:$0xff]
        %v939 = vld [vmem:[%s4 + $0x40] sm:$0xff]
        %v940 = vld [vmem:[%s4 + $0x48] sm:$0xff]
        %v941 = vld [vmem:[%s4 + $0x50] sm:$0xff]
        %v942 = vld [vmem:[%s4 + $0x58] sm:$0xff]
        %v943 = vld [vmem:[%s4 + $0x60] sm:$0xff]
        %v944 = vld [vmem:[%s4 + $0x68] sm:$0xff]
        %v945 = vld [vmem:[%s4 + $0x70] sm:$0xff]
        %v946 = vld [vmem:[%s4 + $0x78] sm:$0xff]
        %v947 = vld [vmem:[#allocation10] sm:$0x3]
        %v949 = vlaneseq
        %v950 = vshrl.u32 %v949, 7
        %v951 = vsub.s32 0, %v950
        %v952 = vrot.slane %v947, %v951
        %v953 = vlaneseq
        %v954 = vshrl.u32 %v953, 7
        %v955 = vsub.s32 1, %v954
        %v956 = vrot.slane %v947, %v955
        %v960 = vsel %vm669, %v668, 0
        %962 = vmatprep.subr.mxu0 %v932
        %963 = vmatpush1.msra.mxu0 %v931
        %964 = vmatprep.subr.mxu0 %v934
        %965 = vmatpush1.msra.mxu0 %v933
        %966 = vmatprep.subr.mxu0 %v936
        %967 = vmatpush1.msra.mxu0 %v935
        %968 = vmatprep.subr.mxu0 %v938
        %969 = vmatpush1.msra.mxu0 %v937
        %970 = vmatprep.subr.mxu0 %v940
        %971 = vmatpush1.msra.mxu0 %v939
        %972 = vmatprep.subr.mxu0 %v942
        %973 = vmatpush1.msra.mxu0 %v941
        %974 = vmatprep.subr.mxu0 %v944
        %975 = vmatpush1.msra.mxu0 %v943
        %976 = vmatprep.subr.mxu0 %v946
        %977 = vmatpush1.msra.mxu0 %v945
        %978 = vmatprep.subr.mxu0 0.0
        %979 = vmatpush1.msra.mxu0 0.0
        %980 = vmatprep.subr.mxu0 0.0
        %981 = vmatpush1.msra.mxu0 0.0
        %982 = vmatprep.subr.mxu0 0.0
        %983 = vmatpush1.msra.mxu0 0.0
        %984 = vmatprep.subr.mxu0 0.0
        %985 = vmatpush1.msra.mxu0 0.0
        %986 = vmatprep.subr.mxu0 0.0
        %987 = vmatpush1.msra.mxu0 0.0
        %988 = vmatprep.subr.mxu0 0.0
        %989 = vmatpush1.msra.mxu0 0.0
        %990 = vmatprep.subr.mxu0 0.0
        %991 = vmatpush1.msra.mxu0 0.0
        %992 = vmatprep.subr.mxu0 0.0
        %993 = vmatpush1.msra.mxu0 0.0
        %994 = vmatprep.subr.mxu0 0.0
        %995 = vmatpush1.msra.mxu0 0.0
        %996 = vmatprep.subr.mxu0 0.0
        %997 = vmatpush1.msra.mxu0 0.0
        %998 = vmatprep.subr.mxu0 0.0
        %999 = vmatpush1.msra.mxu0 0.0
        %1000 = vmatprep.subr.mxu0 0.0
        %1001 = vmatpush1.msra.mxu0 0.0
        %1002 = vmatprep.subr.mxu0 0.0
        %1003 = vmatpush1.msra.mxu0 0.0
        %1004 = vmatprep.subr.mxu0 0.0
        %1005 = vmatpush1.msra.mxu0 0.0
        %1006 = vmatprep.subr.mxu0 0.0
        %1007 = vmatpush1.msra.mxu0 0.0
        %1008 = vmatprep.subr.mxu0 0.0
        %1009 = vmatpush1.msra.mxu0 0.0
        %1010 = vmatprep.subr.mxu0 0.0
        %1011 = vmatpush1.msra.mxu0 0.0
        %1012 = vmatprep.subr.mxu0 0.0
        %1013 = vmatpush1.msra.mxu0 0.0
        %1014 = vmatprep.subr.mxu0 0.0
        %1015 = vmatpush1.msra.mxu0 0.0
        %1016 = vmatprep.subr.mxu0 0.0
        %1017 = vmatpush1.msra.mxu0 0.0
        %1018 = vmatprep.subr.mxu0 0.0
        %1019 = vmatpush1.msra.mxu0 0.0
        %1020 = vmatprep.subr.mxu0 0.0
        %1021 = vmatpush1.msra.mxu0 0.0
        %1022 = vmatprep.subr.mxu0 0.0
        %1023 = vmatpush1.msra.mxu0 0.0
        %1024 = vmatprep.subr.mxu0 0.0
        %1025 = vmatpush1.msra.mxu0 0.0
        %1026 = vmatprep.mubr.f32.mxu0 0.0
        %1027 = vmatmul.mubr.f32.gmra.mrb[0].mxu0 %v960
        %v1028 = vpop.f32.mrb[0].mxu0
        %v1029 = vadd.f32 %v952, %v1028
        %v1030 = vpop.f32.mrb[0].mxu0
        %v1031 = vadd.f32 %v956, %v1030
        %1032 = vdwg.mxu0
        %1034 = vrot.lane.b32.xlu0 %v1029, 64
        %v1035 = vpop.permute.xlu0 %1034
        %v1036 = vsel %vm669, %v1029, 0
        %v1038 = vsel %vm669, %v1035, 0
        %1040 = vmatprep.subr.mxu0 0.0
        %1041 = vmatpush1.xpose.msra.mxu0 %v1038
        %1042 = vmatprep.subr.mxu0 0.0
        %1043 = vmatpush1.xpose.msra.mxu0 0.0
        %1044 = vmatprep.subr.mxu0 0.0
        %1045 = vmatpush1.xpose.msra.mxu0 0.0
        %1046 = vmatprep.subr.mxu0 0.0
        %1047 = vmatpush1.xpose.msra.mxu0 0.0
        %1048 = vmatprep.subr.mxu0 0.0
        %1049 = vmatpush1.xpose.msra.mxu0 0.0
        %1050 = vmatprep.subr.mxu0 0.0
        %1051 = vmatpush1.xpose.msra.mxu0 0.0
        %1052 = vmatprep.subr.mxu0 0.0
        %1053 = vmatpush1.xpose.msra.mxu0 0.0
        %1054 = vmatprep.subr.mxu0 0.0
        %1055 = vmatpush1.xpose.msra.mxu0 0.0
        %1056 = vmatprep.subr.mxu0 0.0
        %1057 = vmatpush1.xpose.msra.mxu0 0.0
        %1058 = vmatprep.subr.mxu0 0.0
        %1059 = vmatpush1.xpose.msra.mxu0 0.0
        %1060 = vmatprep.subr.mxu0 0.0
        %1061 = vmatpush1.xpose.msra.mxu0 0.0
        %1062 = vmatprep.subr.mxu0 0.0
        %1063 = vmatpush1.xpose.msra.mxu0 0.0
        %1064 = vmatprep.subr.mxu0 0.0
        %1065 = vmatpush1.xpose.msra.mxu0 0.0
        %1066 = vmatprep.subr.mxu0 0.0
        %1067 = vmatpush1.xpose.msra.mxu0 0.0
        %1068 = vmatprep.subr.mxu0 0.0
        %1069 = vmatpush1.xpose.msra.mxu0 0.0
        %1070 = vmatprep.subr.mxu0 0.0
        %1071 = vmatpush1.xpose.msra.mxu0 0.0
        %1072 = vmatprep.subr.mxu0 0.0
        %1073 = vmatpush1.xpose.msra.mxu0 0.0
        %1074 = vmatprep.subr.mxu0 0.0
        %1075 = vmatpush1.xpose.msra.mxu0 0.0
        %1076 = vmatprep.subr.mxu0 0.0
        %1077 = vmatpush1.xpose.msra.mxu0 0.0
        %1078 = vmatprep.subr.mxu0 0.0
        %1079 = vmatpush1.xpose.msra.mxu0 0.0
        %1080 = vmatprep.subr.mxu0 0.0
        %1081 = vmatpush1.xpose.msra.mxu0 0.0
        %1082 = vmatprep.subr.mxu0 0.0
        %1083 = vmatpush1.xpose.msra.mxu0 0.0
        %1084 = vmatprep.subr.mxu0 0.0
        %1085 = vmatpush1.xpose.msra.mxu0 0.0
        %1086 = vmatprep.subr.mxu0 0.0
        %1087 = vmatpush1.xpose.msra.mxu0 0.0
        %1088 = vmatprep.subr.mxu0 0.0
        %1089 = vmatpush1.xpose.msra.mxu0 0.0
        %1090 = vmatprep.subr.mxu0 0.0
        %1091 = vmatpush1.xpose.msra.mxu0 0.0
        %1092 = vmatprep.subr.mxu0 0.0
        %1093 = vmatpush1.xpose.msra.mxu0 0.0
        %1094 = vmatprep.subr.mxu0 0.0
        %1095 = vmatpush1.xpose.msra.mxu0 0.0
        %1096 = vmatprep.subr.mxu0 0.0
        %1097 = vmatpush1.xpose.msra.mxu0 0.0
        %1098 = vmatprep.subr.mxu0 0.0
        %1099 = vmatpush1.xpose.msra.mxu0 0.0
        %1100 = vmatprep.subr.mxu0 0.0
        %1101 = vmatpush1.xpose.msra.mxu0 0.0
        %1102 = vmatprep.subr.mxu0 0.0
        %1103 = vmatpush1.xpose.msra.mxu0 0.0
        %1104 = vmatprep.mubr.f32.mxu0 0.0
        %1105 = vmatmul.mubr.f32.gmra.mrb[0].mxu0 %v1036
        %v1106 = vpop.f32.mrb[0].mxu0
        %v1107 = vadd.f32 0.0, %v1106
        %v1108 = vpop.f32.mrb[0].mxu0
        %1109 = vdwg.mxu0
        %v1110 = vsel %vm857, %v1107, -inf
        %1111 = vmax.xlane.f32.xlu0 %v1110
        %v1112 = vpop.xlane.xlu0 %1111
        %v1113 = vsub.f32 %v1107, %v1112
        %v1114 = vmul.f32 %v1113, 1.442695
        %v1115 = vpow.pop %v1114
        %v1116 = vsel %vm857, %v1115, 0.0
        %1117 = vadd.xlane.f32.xlu0 %v1116
        %v1118 = vpop.xlane.xlu0 %1117
        %v1119 = vrcp.pop %v1118
        %v1120 = vmul.f32 %v1115, %v1119
        %v1122 = vsel %vm857, %v1120, 0
        %1124 = vmatprep.subr.mxu0 0.0
        %1125 = vmatpush1.msra.mxu0 %v1031
        %1126 = vmatprep.subr.mxu0 0.0
        %1127 = vmatpush1.msra.mxu0 0.0
        %1128 = vmatprep.subr.mxu0 0.0
        %1129 = vmatpush1.msra.mxu0 0.0
        %1130 = vmatprep.subr.mxu0 0.0
        %1131 = vmatpush1.msra.mxu0 0.0
        %1132 = vmatprep.subr.mxu0 0.0
        %1133 = vmatpush1.msra.mxu0 0.0
        %1134 = vmatprep.subr.mxu0 0.0
        %1135 = vmatpush1.msra.mxu0 0.0
        %1136 = vmatprep.subr.mxu0 0.0
        %1137 = vmatpush1.msra.mxu0 0.0
        %1138 = vmatprep.subr.mxu0 0.0
        %1139 = vmatpush1.msra.mxu0 0.0
        %1140 = vmatprep.subr.mxu0 0.0
        %1141 = vmatpush1.msra.mxu0 0.0
        %1142 = vmatprep.subr.mxu0 0.0
        %1143 = vmatpush1.msra.mxu0 0.0
        %1144 = vmatprep.subr.mxu0 0.0
        %1145 = vmatpush1.msra.mxu0 0.0
        %1146 = vmatprep.subr.mxu0 0.0
        %1147 = vmatpush1.msra.mxu0 0.0
        %1148 = vmatprep.subr.mxu0 0.0
        %1149 = vmatpush1.msra.mxu0 0.0
        %1150 = vmatprep.subr.mxu0 0.0
        %1151 = vmatpush1.msra.mxu0 0.0
        %1152 = vmatprep.subr.mxu0 0.0
        %1153 = vmatpush1.msra.mxu0 0.0
        %1154 = vmatprep.subr.mxu0 0.0
        %1155 = vmatpush1.msra.mxu0 0.0
        %1156 = vmatprep.subr.mxu0 0.0
        %1157 = vmatpush1.msra.mxu0 0.0
        %1158 = vmatprep.subr.mxu0 0.0
        %1159 = vmatpush1.msra.mxu0 0.0
        %1160 = vmatprep.subr.mxu0 0.0
        %1161 = vmatpush1.msra.mxu0 0.0
        %1162 = vmatprep.subr.mxu0 0.0
        %1163 = vmatpush1.msra.mxu0 0.0
        %1164 = vmatprep.subr.mxu0 0.0
        %1165 = vmatpush1.msra.mxu0 0.0
        %1166 = vmatprep.subr.mxu0 0.0
        %1167 = vmatpush1.msra.mxu0 0.0
        %1168 = vmatprep.subr.mxu0 0.0
        %1169 = vmatpush1.msra.mxu0 0.0
        %1170 = vmatprep.subr.mxu0 0.0
        %1171 = vmatpush1.msra.mxu0 0.0
        %1172 = vmatprep.subr.mxu0 0.0
        %1173 = vmatpush1.msra.mxu0 0.0
        %1174 = vmatprep.subr.mxu0 0.0
        %1175 = vmatpush1.msra.mxu0 0.0
        %1176 = vmatprep.subr.mxu0 0.0
        %1177 = vmatpush1.msra.mxu0 0.0
        %1178 = vmatprep.subr.mxu0 0.0
        %1179 = vmatpush1.msra.mxu0 0.0
        %1180 = vmatprep.subr.mxu0 0.0
        %1181 = vmatpush1.msra.mxu0 0.0
        %1182 = vmatprep.subr.mxu0 0.0
        %1183 = vmatpush1.msra.mxu0 0.0
        %1184 = vmatprep.subr.mxu0 0.0
        %1185 = vmatpush1.msra.mxu0 0.0
        %1186 = vmatprep.subr.mxu0 0.0
        %1187 = vmatpush1.msra.mxu0 0.0
        %1188 = vmatprep.mubr.f32.mxu0 0.0
        %1189 = vmatmul.mubr.f32.gmra.mrb[0].mxu0 %v1122
        %v1190 = vpop.f32.mrb[0].mxu0
        %v1191 = vadd.f32 0.0, %v1190
        %v1192 = vpop.f32.mrb[0].mxu0
        %1193 = vdwg.mxu0
        %v1194 = vld [vmem:[%s6] sm:$0xff]
        %v1195 = vld [vmem:[%s6 + $0x8] sm:$0xff]
        %v1196 = vld [vmem:[%s6 + $0x10] sm:$0xff]
        %v1197 = vld [vmem:[%s6 + $0x18] sm:$0xff]
        %v1198 = vld [vmem:[%s6 + $0x20] sm:$0xff]
        %v1199 = vld [vmem:[%s6 + $0x28] sm:$0xff]
        %v1200 = vld [vmem:[%s6 + $0x30] sm:$0xff]
        %v1201 = vld [vmem:[%s6 + $0x38] sm:$0xff]
        %v1202 = vlaneseq
        %v1203 = vshrl.u32 %v1202, 7
        %v1204 = vsub.s32 0, %v1203
        %v1205 = vrot.slane %v557, %v1204
        %v1207 = vsel %vm669, %v1191, 0
        %1209 = vmatprep.subr.mxu0 0.0
        %1210 = vmatpush1.msra.mxu0 %v1194
        %1211 = vmatprep.subr.mxu0 0.0
        %1212 = vmatpush1.msra.mxu0 %v1195
        %1213 = vmatprep.subr.mxu0 0.0
        %1214 = vmatpush1.msra.mxu0 %v1196
        %1215 = vmatprep.subr.mxu0 0.0
        %1216 = vmatpush1.msra.mxu0 %v1197
        %1217 = vmatprep.subr.mxu0 0.0
        %1218 = vmatpush1.msra.mxu0 %v1198
        %1219 = vmatprep.subr.mxu0 0.0
        %1220 = vmatpush1.msra.mxu0 %v1199
        %1221 = vmatprep.subr.mxu0 0.0
        %1222 = vmatpush1.msra.mxu0 %v1200
        %1223 = vmatprep.subr.mxu0 0.0
        %1224 = vmatpush1.msra.mxu0 %v1201
        %1225 = vmatprep.subr.mxu0 0.0
        %1226 = vmatpush1.msra.mxu0 0.0
        %1227 = vmatprep.subr.mxu0 0.0
        %1228 = vmatpush1.msra.mxu0 0.0
        %1229 = vmatprep.subr.mxu0 0.0
        %1230 = vmatpush1.msra.mxu0 0.0
        %1231 = vmatprep.subr.mxu0 0.0
        %1232 = vmatpush1.msra.mxu0 0.0
        %1233 = vmatprep.subr.mxu0 0.0
        %1234 = vmatpush1.msra.mxu0 0.0
        %1235 = vmatprep.subr.mxu0 0.0
        %1236 = vmatpush1.msra.mxu0 0.0
        %1237 = vmatprep.subr.mxu0 0.0
        %1238 = vmatpush1.msra.mxu0 0.0
        %1239 = vmatprep.subr.mxu0 0.0
        %1240 = vmatpush1.msra.mxu0 0.0
        %1241 = vmatprep.subr.mxu0 0.0
        %1242 = vmatpush1.msra.mxu0 0.0
        %1243 = vmatprep.subr.mxu0 0.0
        %1244 = vmatpush1.msra.mxu0 0.0
        %1245 = vmatprep.subr.mxu0 0.0
        %1246 = vmatpush1.msra.mxu0 0.0
        %1247 = vmatprep.subr.mxu0 0.0
        %1248 = vmatpush1.msra.mxu0 0.0
        %1249 = vmatprep.subr.mxu0 0.0
        %1250 = vmatpush1.msra.mxu0 0.0
        %1251 = vmatprep.subr.mxu0 0.0
        %1252 = vmatpush1.msra.mxu0 0.0
        %1253 = vmatprep.subr.mxu0 0.0
        %1254 = vmatpush1.msra.mxu0 0.0
        %1255 = vmatprep.subr.mxu0 0.0
        %1256 = vmatpush1.msra.mxu0 0.0
        %1257 = vmatprep.subr.mxu0 0.0
        %1258 = vmatpush1.msra.mxu0 0.0
        %1259 = vmatprep.subr.mxu0 0.0
        %1260 = vmatpush1.msra.mxu0 0.0
        %1261 = vmatprep.subr.mxu0 0.0
        %1262 = vmatpush1.msra.mxu0 0.0
        %1263 = vmatprep.subr.mxu0 0.0
        %1264 = vmatpush1.msra.mxu0 0.0
        %1265 = vmatprep.subr.mxu0 0.0
        %1266 = vmatpush1.msra.mxu0 0.0
        %1267 = vmatprep.subr.mxu0 0.0
        %1268 = vmatpush1.msra.mxu0 0.0
        %1269 = vmatprep.subr.mxu0 0.0
        %1270 = vmatpush1.msra.mxu0 0.0
        %1271 = vmatprep.subr.mxu0 0.0
        %1272 = vmatpush1.msra.mxu0 0.0
        %1273 = vmatprep.mubr.f32.mxu0 0.0
        %1274 = vmatmul.mubr.f32.gmra.mrb[0].mxu0 %v1207
        %v1275 = vpop.f32.mrb[0].mxu0
        %v1276 = vadd.f32 %v1205, %v1275
        %v1277 = vpop.f32.mrb[0].mxu0
        %1278 = vdwg.mxu0
        %v1279 = vadd.f32 %v928, %v668
        %v1280 = vmul.f32 %v1279, 0.5
        %v1281 = vmul.f32 %v1279, 0.70710677
        %v1282 = verf.f32.pop %v1281
        %v1283 = vadd.f32 %v1282, 1.0
        %v1284 = vmul.f32 %v1280, %v1283
        %v1285 = vadd.f32 %v1284, %v1276
        %v1286 = vld [vmem:[%s7] sm:$0xff]
        %v1287 = vld [vmem:[%s7 + $0x8] sm:$0xff]
        %v1288 = vld [vmem:[%s7 + $0x10] sm:$0xff]
        %v1289 = vld [vmem:[%s7 + $0x18] sm:$0xff]
        %v1290 = vld [vmem:[%s7 + $0x20] sm:$0xff]
        %v1291 = vld [vmem:[%s7 + $0x28] sm:$0xff]
        %v1292 = vld [vmem:[%s7 + $0x30] sm:$0xff]
        %v1293 = vld [vmem:[%s7 + $0x38] sm:$0xff]
        %v1294 = vlaneseq
        %v1295 = vshrl.u32 %v1294, 7
        %v1296 = vsub.s32 0, %v1295
        %v1297 = vrot.slane %v553, %v1296
        %v1299 = vsel %vm669, %v1285, 0
        %1301 = vmatprep.subr.mxu0 0.0
        %1302 = vmatpush1.msra.mxu0 %v1286
        %1303 = vmatprep.subr.mxu0 0.0
        %1304 = vmatpush1.msra.mxu0 %v1287
        %1305 = vmatprep.subr.mxu0 0.0
        %1306 = vmatpush1.msra.mxu0 %v1288
        %1307 = vmatprep.subr.mxu0 0.0
        %1308 = vmatpush1.msra.mxu0 %v1289
        %1309 = vmatprep.subr.mxu0 0.0
        %1310 = vmatpush1.msra.mxu0 %v1290
        %1311 = vmatprep.subr.mxu0 0.0
        %1312 = vmatpush1.msra.mxu0 %v1291
        %1313 = vmatprep.subr.mxu0 0.0
        %1314 = vmatpush1.msra.mxu0 %v1292
        %1315 = vmatprep.subr.mxu0 0.0
        %1316 = vmatpush1.msra.mxu0 %v1293
        %1317 = vmatprep.subr.mxu0 0.0
        %1318 = vmatpush1.msra.mxu0 0.0
        %1319 = vmatprep.subr.mxu0 0.0
        %1320 = vmatpush1.msra.mxu0 0.0
        %1321 = vmatprep.subr.mxu0 0.0
        %1322 = vmatpush1.msra.mxu0 0.0
        %1323 = vmatprep.subr.mxu0 0.0
        %1324 = vmatpush1.msra.mxu0 0.0
        %1325 = vmatprep.subr.mxu0 0.0
        %1326 = vmatpush1.msra.mxu0 0.0
        %1327 = vmatprep.subr.mxu0 0.0
        %1328 = vmatpush1.msra.mxu0 0.0
        %1329 = vmatprep.subr.mxu0 0.0
        %1330 = vmatpush1.msra.mxu0 0.0
        %1331 = vmatprep.subr.mxu0 0.0
        %1332 = vmatpush1.msra.mxu0 0.0
        %1333 = vmatprep.subr.mxu0 0.0
        %1334 = vmatpush1.msra.mxu0 0.0
        %1335 = vmatprep.subr.mxu0 0.0
        %1336 = vmatpush1.msra.mxu0 0.0
        %1337 = vmatprep.subr.mxu0 0.0
        %1338 = vmatpush1.msra.mxu0 0.0
        %1339 = vmatprep.subr.mxu0 0.0
        %1340 = vmatpush1.msra.mxu0 0.0
        %1341 = vmatprep.subr.mxu0 0.0
        %1342 = vmatpush1.msra.mxu0 0.0
        %1343 = vmatprep.subr.mxu0 0.0
        %1344 = vmatpush1.msra.mxu0 0.0
        %1345 = vmatprep.subr.mxu0 0.0
        %1346 = vmatpush1.msra.mxu0 0.0
        %1347 = vmatprep.subr.mxu0 0.0
        %1348 = vmatpush1.msra.mxu0 0.0
        %1349 = vmatprep.subr.mxu0 0.0
        %1350 = vmatpush1.msra.mxu0 0.0
        %1351 = vmatprep.subr.mxu0 0.0
        %1352 = vmatpush1.msra.mxu0 0.0
        %1353 = vmatprep.subr.mxu0 0.0
        %1354 = vmatpush1.msra.mxu0 0.0
        %1355 = vmatprep.subr.mxu0 0.0
        %1356 = vmatpush1.msra.mxu0 0.0
        %1357 = vmatprep.subr.mxu0 0.0
        %1358 = vmatpush1.msra.mxu0 0.0
        %1359 = vmatprep.subr.mxu0 0.0
        %1360 = vmatpush1.msra.mxu0 0.0
        %1361 = vmatprep.subr.mxu0 0.0
        %1362 = vmatpush1.msra.mxu0 0.0
        %1363 = vmatprep.subr.mxu0 0.0
        %1364 = vmatpush1.msra.mxu0 0.0
        %1365 = vmatprep.mubr.f32.mxu0 0.0
        %1366 = vmatmul.mubr.f32.gmra.mrb[0].mxu0 %v1299
        %v1367 = vpop.f32.mrb[0].mxu0
        %v1368 = vadd.f32 %v1297, %v1367
        %v1369 = vpop.f32.mrb[0].mxu0
        %1370 = vdwg.mxu0
        %v1371 = vmul.f32 %v1368, 0.5
        %v1372 = vmul.f32 %v1368, 0.70710677
        %v1373 = verf.f32.pop %v1372
        %v1374 = vadd.f32 %v1373, 1.0
        %v1375 = vmul.f32 %v1371, %v1374
        %v1376 = vadd.f32 %v1375, %v550
        %1377 = vst.msk [vmem:[%s549] sm:$0xff] %vm558, %v1376
        %s1378 = sand.u32 %s341, 1
        %s1379 = scalar_lea.sflag [#allocation4], %s1378
        %s1380 = sand.u32 %s341, 1
        %s1381 = smul.addr %s1380, 8
        %s1382 = scalar_lea.vmem [#allocation13], %s1381
        // Predicated region
        $region101: #{tpu_custom_call.1} parent=75 // pred_check
          %p1383 = pneg %p351
        $region102: #{tpu_custom_call.1} parent=75 // pred_check_branch
          %1385 = sbr.rel (%p1383) target = $region104
        $region103: #{tpu_custom_call.1} parent=75 // pred_region
          %s1387 = ssub.s32 128, 128
          %1388 = vsyncadd %s1379, %s1387
          %s1389 = smul.addr %s34, 128
          %s1390 = scalar_lea.hbm %s14, %s1389
          %s1392 = sshll.u32 %s1382, 4
          %s1393 = int_to_ptr.vmem [resolvable:$true] %s1392
          %1395 = dma.vmem_to_hbm [thread:$0]  %s1393, 128, %s1390, %s1379
        $region104: #{tpu_custom_call.1} parent=75 // pred_fallthru
          _
      $region76: #{tpu_custom_call.1} parent=5 // pred_fallthru
        _
      %p1396 = scmp.le.s32.totalorder 2, %s29
      // Predicated region
      $region105: #{tpu_custom_call.1} parent=5 // pred_check
        %p1397 = pneg %p1396
      $region106: #{tpu_custom_call.1} parent=5 // pred_check_branch
        %1399 = sbr.rel (%p1397) target = $region108
      $region107: #{tpu_custom_call.1} parent=5 // pred_region
        %s1400 = ssub.s32 %s29, 2
        // Predicated region
        $region109: #{tpu_custom_call.1} parent=107 // pred_check
          %p1401 = pneg %p357
        $region110: #{tpu_custom_call.1} parent=107 // pred_check_branch
          %1403 = sbr.rel (%p1401) target = $region112
        $region111: #{tpu_custom_call.1} parent=107 // pred_region
          %s1404 = sand.u32 %s342, 1
          %s1405 = scalar_lea.sflag [#allocation4], %s1404
          %s1406 = sand.u32 %s342, 1
          %s1407 = smul.addr %s1406, 8
          %s1408 = scalar_lea.vmem [#allocation13], %s1407
          %1409 = dma.done %s1405, 128
        $region112: #{tpu_custom_call.1} parent=107 // pred_fallthru
          _
      $region108: #{tpu_custom_call.1} parent=5 // pred_fallthru
        _
    $region6: #{tpu_custom_call.1} parent=1 // loop_footer
      %s33 = sadd.s32 1, %s29
    $region7: #{tpu_custom_call.1} parent=1 // loop_footer_branch
      %28 = sbr.rel target = $region3
    $region8: #{tpu_custom_call.1} parent=1 // loop_exit
      _
    %1410 = vsyncpa [#allocation3], 1
    %s1411 = scalar_lea.sflag [#allocation3], 1
    %1412 = vsyncpa %s1411, 1
    %1413 = vsyncpa [#allocation6], 1
    %1414 = vsyncpa [#allocation9], 1
    %1415 = vsyncpa [#allocation12], 1
    %1416 = vsyncpa [#allocation4], 1
    %s1417 = scalar_lea.sflag [#allocation4], 1
    %1418 = vsyncpa %s1417, 1

</llo_original>
